<compile_context>
chip_gen: v6e
topology: v6e:2x2x1
jax: 0.10.0
libtpu: 0.0.40
codegen_flags: <defaults>
</compile_context>

<pallas_src>
import functools

import jax
import jax.numpy as jnp
from jax.experimental import pallas as pl
from jax.experimental.pallas import tpu as pltpu

BN_EPS = 1e-5


def _round_up(v, m):
    return ((v + m - 1) // m) * m


def _vmem_cap_bytes():
    # Generation-aware VMEM capacity (v5e/v6e: 128 MiB, v7x: 64 MiB per TensorCore).
    try:
        return int(pltpu.get_tpu_info().vmem_capacity_bytes)
    except Exception:
        return 64 << 20  # conservative default: smallest (v7x per-TC) budget


def _pred_mlp_kernel(x_ref, w1_ref, g_ref, beta_ref, w2_ref, b2_ref, o_ref,
                     h_ref, sum_ref, sq_ref, scale_ref, shift_ref,
                     *, n_rows, tile_rows, ragged):
    phase = pl.program_id(0)
    i = pl.program_id(1)

    @pl.when(phase == 0)
    def _phase0():
        @pl.when(i == 0)
        def _init():
            sum_ref[...] = jnp.zeros_like(sum_ref)
            sq_ref[...] = jnp.zeros_like(sq_ref)

        # bf16 MXU operands, f32 accumulation; stats stay in f32.
        h = jnp.dot(x_ref[...].astype(jnp.bfloat16), w1_ref[...],
                    preferred_element_type=jnp.float32)
        if ragged:
            # Rows past the true batch size hold undefined (OOB-read) data: zero
            # them so the stats and the stash are exact.
            row = i * tile_rows + jax.lax.broadcasted_iota(
                jnp.int32, (tile_rows, 1), 0)
            h = jnp.where(row < n_rows, h, 0.0)
        sum_ref[...] += jnp.sum(h, axis=0, keepdims=True)
        sq_ref[...] += jnp.sum(h * h, axis=0, keepdims=True)
        # bf16 stash: halves the persistent VMEM footprint and the vst/vld traffic.
        h_ref[i] = h.astype(jnp.bfloat16)

    @pl.when(phase == 1)
    def _phase1():
        @pl.when(i == 0)
        def _fold_bn():
            # Fold BatchNorm (batch stats, biased var) + affine into scale/shift.
            inv_n = jnp.float32(1.0 / n_rows)
            mean = sum_ref[...] * inv_n
            var = jnp.maximum(sq_ref[...] * inv_n - mean * mean, 0.0)
            scale = g_ref[...] * jax.lax.rsqrt(var + BN_EPS)
            scale_ref[...] = scale
            shift_ref[...] = beta_ref[...] - mean * scale

        hn = h_ref[i].astype(jnp.float32) * scale_ref[...] + shift_ref[...]
        hr = jnp.maximum(hn, 0.0).astype(jnp.bfloat16)
        # NOTE: o_ref is only ever written here (phase 1). Its block index is pinned
        # to 0 during phase 0 and the first phase-1 step writes block 0 before the
        # index advances, so no stale writeback can occur.
        o_ref[...] = (
            jnp.dot(hr, w2_ref[...], preferred_element_type=jnp.float32)
            + b2_ref[...]
        )


def prediction_mlp(x, w1, b1, gamma, beta, w2, b2, *, tile_n=512):
    n, d_in = x.shape
    h_dim = w1.shape[1]
    d_out = w2.shape[1]

    # b1 is accepted for module-API fidelity but is exactly cancelled by the
    # training-mode BatchNorm mean subtraction -> never enters the kernel.
    del b1

    f32, bf16 = 4, 2
    vmem_cap = _vmem_cap_bytes()
    budget = vmem_cap - (8 << 20)  # leave Mosaic-internal headroom

    # Tile-size-independent VMEM residents: bf16 weights (single-buffered when
    # supported), bf16 h stash for ~the padded batch, small per-channel params/stats.
    weights_bytes = (d_in * h_dim + h_dim * d_out) * bf16
    stash_bytes = _round_up(n, 256) * h_dim * bf16
    small_bytes = 8 * (h_dim + d_out) * f32 + (1 << 20)
    resident = weights_bytes + stash_bytes + small_bytes
    # TODO(synk): once n * h_dim * 2 bytes no longer fits VMEM (very large batches,
    # esp. on v7x's 64 MiB), spill the h stash to an HBM scratch (memory_space=pl.ANY
    # + make_async_copy) and re-stream it in phase 1.

    # Row tile: as big as the remaining budget allows (double-buffered f32 x/out
    # tiles), rounded to the MXU-friendly 256 granularity when the batch allows.
    per_row = 2 * (d_in + d_out) * f32
    tn_cap = max(8, (budget - resident) // per_row)
    want = int(min(tile_n, _round_up(n, 8), tn_cap))
    tn = 8
    for g in (256, 128, 8):
        if want >= g:
            tn = (want // g) * g
            break
    nt = pl.cdiv(n, tn)
    ragged = (nt * tn != n)

    def build(const_bufs):
        pipe = {} if const_bufs is None else dict(pipeline_mode=pl.Buffered(const_bufs))

        def const_spec(shape):
            return pl.BlockSpec(shape, lambda p, i: (0, 0), **pipe)

        grid_spec = pltpu.PrefetchScalarGridSpec(
            num_scalar_prefetch=0,
            grid=(2, nt),  # (phase, batch tile)
            in_specs=[
                # x advances with the tile in phase 0; pinned to the last block in
                # phase 1 so it is never re-fetched there.
                pl.BlockSpec((tn, d_in),
                             lambda p, i: (i * (1 - p) + (nt - 1) * p, 0)),
                const_spec((d_in, h_dim)),   # W1 (bf16, VMEM resident)
                const_spec((1, h_dim)),      # gamma
                const_spec((1, h_dim)),      # beta
                const_spec((h_dim, d_out)),  # W2 (bf16, VMEM resident)
                const_spec((1, d_out)),      # b2
            ],
            # Output only advances in phase 1 (lane-dense full-d_out blocks); the
            # trailing partial row block of a ragged batch is masked on writeback
            # by Pallas, so no post-kernel slice is needed.
            out_specs=pl.BlockSpec((tn, d_out), lambda p, i: (i * p, 0)),
            scratch_shapes=[
                pltpu.VMEM((nt, tn, h_dim), jnp.bfloat16),  # h stash (phase0 -> phase1)
                pltpu.VMEM((1, h_dim), jnp.float32),        # sum(h)
                pltpu.VMEM((1, h_dim), jnp.float32),        # sum(h*h)
                pltpu.VMEM((1, h_dim), jnp.float32),        # folded BN scale
                pltpu.VMEM((1, h_dim), jnp.float32),        # folded BN shift
            ],
        )

        bufs = 2 if const_bufs is None else const_bufs
        vmem_bytes = (
            2 * tn * d_in * f32          # x tile, double-buffered
            + 2 * tn * d_out * f32       # out tile, double-buffered
            + bufs * weights_bytes       # resident bf16 weights
            + nt * tn * h_dim * bf16     # bf16 h stash
            + small_bytes                # (1, dim) params + stats scratch
            + (4 << 20)                  # Mosaic internal scratch headroom
        )
        vmem_limit = int(min(max(vmem_bytes, 4 << 20), budget))

        return pl.pallas_call(
            functools.partial(_pred_mlp_kernel, n_rows=n, tile_rows=tn,
                              ragged=ragged),
            out_shape=jax.ShapeDtypeStruct((n, d_out), jnp.float32),
            grid_spec=grid_spec,
            compiler_params=pltpu.CompilerParams(
                # Both axes carry cross-iteration state (stats accumulation, phase
                # ordering), so neither can be "parallel".
                # TODO(synk): on v7x, split the batch-tile axis across the two
                # TensorCores (core_parallel / pl.core_map) with per-core partial
                # stats combined via CMEM before the phase-1 BN fold (~2x).
                dimension_semantics=("arbitrary", "arbitrary"),
                vmem_limit_bytes=vmem_limit,
            ),
        )

    args = (x, w1.astype(jnp.bfloat16), gamma.reshape(1, h_dim),
            beta.reshape(1, h_dim), w2.astype(jnp.bfloat16),
            b2.reshape(1, d_out))
    try:
        # Constant index_maps -> a single pipeline buffer is enough for the weights.
        return build(const_bufs=1)(*args)
    except Exception:
        # Fallback if pl.Buffered(1) is not supported by this jax/Mosaic version.
        return build(const_bufs=None)(*args)


def _reference(x, w1, b1, gamma, beta, w2, b2):
    h = x @ w1 + b1
    mean = jnp.mean(h, axis=0, keepdims=True)
    var = jnp.mean((h - mean) ** 2, axis=0, keepdims=True)
    hn = (h - mean) / jnp.sqrt(var + BN_EPS) * gamma + beta
    hr = jnp.maximum(hn, 0.0)
    return hr @ w2 + b2


if __name__ == "__main__":
    # Small shapes consistent with the module (real dims are 512/128/512).
    N, IN_DIM, HIDDEN, OUT_DIM = 64, 256, 128, 256
    TN = 16  # 4 batch tiles -> exercises the two-phase pipelined grid

    key = jax.random.PRNGKey(0)
    kx, kw1, kb1, kg, kbt, kw2, kb2 = jax.random.split(key, 7)

    x = jax.random.normal(kx, (N, IN_DIM), dtype=jnp.float32)

    lim1 = 1.0 / (IN_DIM ** 0.5)
    lim2 = 1.0 / (HIDDEN ** 0.5)
    w1 = jax.random.uniform(kw1, (IN_DIM, HIDDEN), minval=-lim1, maxval=lim1, dtype=jnp.float32)
    b1 = jax.random.uniform(kb1, (HIDDEN,), minval=-lim1, maxval=lim1, dtype=jnp.float32)
    gamma = jnp.ones((HIDDEN,), jnp.float32) + 0.1 * jax.random.normal(kg, (HIDDEN,), jnp.float32)
    beta = 0.1 * jax.random.normal(kbt, (HIDDEN,), dtype=jnp.float32)
    w2 = jax.random.uniform(kw2, (HIDDEN, OUT_DIM), minval=-lim2, maxval=lim2, dtype=jnp.float32)
    b2 = jax.random.uniform(kb2, (OUT_DIM,), minval=-lim2, maxval=lim2, dtype=jnp.float32)

    # bf16 MXU operands -> compare against the f32 reference with a bf16-level tolerance.
    TOL = dict(atol=2e-2, rtol=2e-2)

    # Aligned batch (N multiple of TN). Reference keeps b1 to verify exact cancellation.
    out = jax.block_until_ready(prediction_mlp(x, w1, b1, gamma, beta, w2, b2, tile_n=TN))
    ref = _reference(x, w1, b1.reshape(1, -1), gamma.reshape(1, -1),
                     beta.reshape(1, -1), w2, b2.reshape(1, -1))
    assert out.shape == (N, OUT_DIM)
    assert jnp.allclose(out, ref, **TOL)

    # Unaligned batch -> exercises in-kernel stats masking + masked edge-block writeback.
    N2 = 52
    x2 = x[:N2]
    out2 = jax.block_until_ready(prediction_mlp(x2, w1, b1, gamma, beta, w2, b2, tile_n=TN))
    ref2 = _reference(x2, w1, b1.reshape(1, -1), gamma.reshape(1, -1),
                      beta.reshape(1, -1), w2, b2.reshape(1, -1))
    assert out2.shape == (N2, OUT_DIM)
    assert jnp.allclose(out2, ref2, **TOL)

    print("KERNEL_OK")
</pallas_src>

<mosaic_0001>
module attributes {stable_mosaic.version = 11 : i64} {
  func.func @_pred_mlp_kernel(%arg0: i32, %arg1: i32, %arg2: memref<16x256xf32, #tpu.memory_space<vmem>>, %arg3: memref<256x128xbf16, #tpu.memory_space<vmem>>, %arg4: memref<1x128xf32, #tpu.memory_space<vmem>>, %arg5: memref<1x128xf32, #tpu.memory_space<vmem>>, %arg6: memref<128x256xbf16, #tpu.memory_space<vmem>>, %arg7: memref<1x256xf32, #tpu.memory_space<vmem>>, %arg8: memref<16x256xf32, #tpu.memory_space<vmem>>, %arg9: memref<4x16x128xbf16, #tpu.memory_space<vmem>>, %arg10: memref<1x128xf32, #tpu.memory_space<vmem>>, %arg11: memref<1x128xf32, #tpu.memory_space<vmem>>, %arg12: memref<1x128xf32, #tpu.memory_space<vmem>>, %arg13: memref<1x128xf32, #tpu.memory_space<vmem>>) attributes {dimension_semantics = [#tpu.dimension_semantics<arbitrary>, #tpu.dimension_semantics<arbitrary>], iteration_bounds = array<i64: 2, 4>, scalar_prefetch = 0 : i64, scratch_operands = 5 : i64, tpu.core_type = #tpu.core_type<tc>, window_params = [{transform_indices = @transform_0, window_bounds = array<i64: 16, 256>}, {pipeline_mode = #tpu.pipeline_mode<synchronous>, transform_indices = @transform_1, window_bounds = array<i64: 256, 128>}, {pipeline_mode = #tpu.pipeline_mode<synchronous>, transform_indices = @transform_2, window_bounds = array<i64: 1, 128>}, {pipeline_mode = #tpu.pipeline_mode<synchronous>, transform_indices = @transform_3, window_bounds = array<i64: 1, 128>}, {pipeline_mode = #tpu.pipeline_mode<synchronous>, transform_indices = @transform_4, window_bounds = array<i64: 128, 256>}, {pipeline_mode = #tpu.pipeline_mode<synchronous>, transform_indices = @transform_5, window_bounds = array<i64: 1, 256>}, {transform_indices = @transform_6, window_bounds = array<i64: 16, 256>}]} {
    %c0_i32 = arith.constant 0 : i32
    %0 = arith.cmpi eq, %arg0, %c0_i32 : i32
    %1 = arith.extui %0 : i1 to i32
    %c0_i32_0 = arith.constant 0 : i32
    %2 = arith.cmpi ne, %1, %c0_i32_0 : i32
    scf.if %2 {
      %c0_i32_2 = arith.constant 0 : i32
      %6 = arith.cmpi eq, %arg1, %c0_i32_2 : i32
      %7 = arith.extui %6 : i1 to i32
      %c0_i32_3 = arith.constant 0 : i32
      %8 = arith.cmpi ne, %7, %c0_i32_3 : i32
      scf.if %8 {
        %cst_19 = arith.constant 0.000000e+00 : f32
        %29 = vector.broadcast %cst_19 : f32 to vector<1x128xf32>
        %c0_20 = arith.constant 0 : index
        %c0_21 = arith.constant 0 : index
        %30 = vector.load %arg10[%c0_20, %c0_21] : memref<1x128xf32, #tpu.memory_space<vmem>>, vector<1x128xf32>
        tpu.vector_store %arg10[%c0_20, %c0_21], %29 {strides = array<i32>} : memref<1x128xf32, #tpu.memory_space<vmem>>, vector<1x128xf32>,
        %cst_22 = arith.constant 0.000000e+00 : f32
        %31 = vector.broadcast %cst_22 : f32 to vector<1x128xf32>
        %c0_23 = arith.constant 0 : index
        %c0_24 = arith.constant 0 : index
        %32 = vector.load %arg11[%c0_23, %c0_24] : memref<1x128xf32, #tpu.memory_space<vmem>>, vector<1x128xf32>
        tpu.vector_store %arg11[%c0_23, %c0_24], %31 {strides = array<i32>} : memref<1x128xf32, #tpu.memory_space<vmem>>, vector<1x128xf32>,
      } else {
      }
      %c0 = arith.constant 0 : index
      %c0_4 = arith.constant 0 : index
      %9 = vector.load %arg2[%c0, %c0_4] : memref<16x256xf32, #tpu.memory_space<vmem>>, vector<16x256xf32>
      %10 = arith.truncf %9 : vector<16x256xf32> to vector<16x256xbf16>
      %c0_5 = arith.constant 0 : index
      %c0_6 = arith.constant 0 : index
      %11 = vector.load %arg3[%c0_5, %c0_6] : memref<256x128xbf16, #tpu.memory_space<vmem>>, vector<256x128xbf16>
      %cst = arith.constant dense<0.000000e+00> : vector<16x128xf32>
      %12 = tpu.matmul %10, %11, %cst {dimension_numbers = #tpu.dot_dimension_numbers<[1], [0], [0], [1], [0, 0, 1, 1], [], []>} : vector<16x256xbf16>, vector<256x128xbf16>, vector<16x128xf32> -> vector<16x128xf32>
      %c0_7 = arith.constant 0 : index
      %c0_8 = arith.constant 0 : index
      %13 = vector.load %arg10[%c0_7, %c0_8] : memref<1x128xf32, #tpu.memory_space<vmem>>, vector<1x128xf32>
      %cst_9 = arith.constant dense<0.000000e+00> : vector<128xf32>
      %14 = vector.multi_reduction <add>, %12, %cst_9 [0] : vector<16x128xf32> to vector<128xf32>
      %15 = vector.shape_cast %14 : vector<128xf32> to vector<1x128xf32>
      %16 = arith.addf %13, %15 : vector<1x128xf32>
      %c0_10 = arith.constant 0 : index
      %c0_11 = arith.constant 0 : index
      %17 = vector.load %arg10[%c0_10, %c0_11] : memref<1x128xf32, #tpu.memory_space<vmem>>, vector<1x128xf32>
      tpu.vector_store %arg10[%c0_10, %c0_11], %16 {strides = array<i32>} : memref<1x128xf32, #tpu.memory_space<vmem>>, vector<1x128xf32>,
      %c0_12 = arith.constant 0 : index
      %c0_13 = arith.constant 0 : index
      %18 = vector.load %arg11[%c0_12, %c0_13] : memref<1x128xf32, #tpu.memory_space<vmem>>, vector<1x128xf32>
      %19 = arith.mulf %12, %12 : vector<16x128xf32>
      %cst_14 = arith.constant dense<0.000000e+00> : vector<128xf32>
      %20 = vector.multi_reduction <add>, %19, %cst_14 [0] : vector<16x128xf32> to vector<128xf32>
      %21 = vector.shape_cast %20 : vector<128xf32> to vector<1x128xf32>
      %22 = arith.addf %18, %21 : vector<1x128xf32>
      %c0_15 = arith.constant 0 : index
      %c0_16 = arith.constant 0 : index
      %23 = vector.load %arg11[%c0_15, %c0_16] : memref<1x128xf32, #tpu.memory_space<vmem>>, vector<1x128xf32>
      tpu.vector_store %arg11[%c0_15, %c0_16], %22 {strides = array<i32>} : memref<1x128xf32, #tpu.memory_space<vmem>>, vector<1x128xf32>,
      %24 = arith.truncf %12 : vector<16x128xf32> to vector<16x128xbf16>
      %25 = arith.index_cast %arg1 : i32 to index
      %c0_17 = arith.constant 0 : index
      %c0_18 = arith.constant 0 : index
      %26 = vector.load %arg9[%25, %c0_17, %c0_18] : memref<4x16x128xbf16, #tpu.memory_space<vmem>>, vector<1x16x128xbf16>
      %27 = vector.shape_cast %26 : vector<1x16x128xbf16> to vector<16x128xbf16>
      %28 = vector.shape_cast %24 : vector<16x128xbf16> to vector<1x16x128xbf16>
      tpu.vector_store %arg9[%25, %c0_17, %c0_18], %28 {strides = array<i32>} : memref<4x16x128xbf16, #tpu.memory_space<vmem>>, vector<1x16x128xbf16>,
    } else {
    }
    %c1_i32 = arith.constant 1 : i32
    %3 = arith.cmpi eq, %arg0, %c1_i32 : i32
    %4 = arith.extui %3 : i1 to i32
    %c0_i32_1 = arith.constant 0 : i32
    %5 = arith.cmpi ne, %4, %c0_i32_1 : i32
    scf.if %5 {
      %c0_i32_2 = arith.constant 0 : i32
      %6 = arith.cmpi eq, %arg1, %c0_i32_2 : i32
      %7 = arith.extui %6 : i1 to i32
      %c0_i32_3 = arith.constant 0 : i32
      %8 = arith.cmpi ne, %7, %c0_i32_3 : i32
      scf.if %8 {
        %c0_16 = arith.constant 0 : index
        %c0_17 = arith.constant 0 : index
        %28 = vector.load %arg10[%c0_16, %c0_17] : memref<1x128xf32, #tpu.memory_space<vmem>>, vector<1x128xf32>
        %cst_18 = arith.constant 1.562500e-02 : f32
        %29 = vector.broadcast %cst_18 : f32 to vector<1x128xf32>
        %30 = arith.mulf %28, %29 : vector<1x128xf32>
        %c0_19 = arith.constant 0 : index
        %c0_20 = arith.constant 0 : index
        %31 = vector.load %arg11[%c0_19, %c0_20] : memref<1x128xf32, #tpu.memory_space<vmem>>, vector<1x128xf32>
        %cst_21 = arith.constant 1.562500e-02 : f32
        %32 = vector.broadcast %cst_21 : f32 to vector<1x128xf32>
        %33 = arith.mulf %31, %32 : vector<1x128xf32>
        %34 = arith.mulf %30, %30 : vector<1x128xf32>
        %35 = arith.subf %33, %34 : vector<1x128xf32>
        %cst_22 = arith.constant 0.000000e+00 : f32
        %36 = vector.broadcast %cst_22 : f32 to vector<1x128xf32>
        %37 = arith.maximumf %35, %36 : vector<1x128xf32>
        %c0_23 = arith.constant 0 : index
        %c0_24 = arith.constant 0 : index
        %38 = vector.load %arg4[%c0_23, %c0_24] : memref<1x128xf32, #tpu.memory_space<vmem>>, vector<1x128xf32>
        %cst_25 = arith.constant 9.99999974E-6 : f32
        %39 = vector.broadcast %cst_25 : f32 to vector<1x128xf32>
        %40 = arith.addf %37, %39 : vector<1x128xf32>
        %41 = math.rsqrt %40 : vector<1x128xf32>
        %42 = arith.mulf %38, %41 : vector<1x128xf32>
        %c0_26 = arith.constant 0 : index
        %c0_27 = arith.constant 0 : index
        %43 = vector.load %arg12[%c0_26, %c0_27] : memref<1x128xf32, #tpu.memory_space<vmem>>, vector<1x128xf32>
        tpu.vector_store %arg12[%c0_26, %c0_27], %42 {strides = array<i32>} : memref<1x128xf32, #tpu.memory_space<vmem>>, vector<1x128xf32>,
        %c0_28 = arith.constant 0 : index
        %c0_29 = arith.constant 0 : index
        %44 = vector.load %arg5[%c0_28, %c0_29] : memref<1x128xf32, #tpu.memory_space<vmem>>, vector<1x128xf32>
        %45 = arith.mulf %30, %42 : vector<1x128xf32>
        %46 = arith.subf %44, %45 : vector<1x128xf32>
        %c0_30 = arith.constant 0 : index
        %c0_31 = arith.constant 0 : index
        %47 = vector.load %arg13[%c0_30, %c0_31] : memref<1x128xf32, #tpu.memory_space<vmem>>, vector<1x128xf32>
        tpu.vector_store %arg13[%c0_30, %c0_31], %46 {strides = array<i32>} : memref<1x128xf32, #tpu.memory_space<vmem>>, vector<1x128xf32>,
      } else {
      }
      %9 = arith.index_cast %arg1 : i32 to index
      %c0 = arith.constant 0 : index
      %c0_4 = arith.constant 0 : index
      %10 = vector.load %arg9[%9, %c0, %c0_4] : memref<4x16x128xbf16, #tpu.memory_space<vmem>>, vector<1x16x128xbf16>
      %11 = vector.shape_cast %10 : vector<1x16x128xbf16> to vector<16x128xbf16>
      %12 = arith.extf %11 : vector<16x128xbf16> to vector<16x128xf32>
      %c0_5 = arith.constant 0 : index
      %c0_6 = arith.constant 0 : index
      %13 = vector.load %arg12[%c0_5, %c0_6] : memref<1x128xf32, #tpu.memory_space<vmem>>, vector<1x128xf32>
      %14 = vector.broadcast %13 : vector<1x128xf32> to vector<16x128xf32>
      %15 = arith.mulf %12, %14 : vector<16x128xf32>
      %c0_7 = arith.constant 0 : index
      %c0_8 = arith.constant 0 : index
      %16 = vector.load %arg13[%c0_7, %c0_8] : memref<1x128xf32, #tpu.memory_space<vmem>>, vector<1x128xf32>
      %17 = vector.broadcast %16 : vector<1x128xf32> to vector<16x128xf32>
      %18 = arith.addf %15, %17 : vector<16x128xf32>
      %cst = arith.constant 0.000000e+00 : f32
      %19 = vector.broadcast %cst : f32 to vector<16x128xf32>
      %20 = arith.maximumf %18, %19 : vector<16x128xf32>
      %21 = arith.truncf %20 : vector<16x128xf32> to vector<16x128xbf16>
      %c0_9 = arith.constant 0 : index
      %c0_10 = arith.constant 0 : index
      %22 = vector.load %arg6[%c0_9, %c0_10] : memref<128x256xbf16, #tpu.memory_space<vmem>>, vector<128x256xbf16>
      %cst_11 = arith.constant dense<0.000000e+00> : vector<16x256xf32>
      %23 = tpu.matmul %21, %22, %cst_11 {dimension_numbers = #tpu.dot_dimension_numbers<[1], [0], [0], [1], [0, 0, 1, 1], [], []>} : vector<16x128xbf16>, vector<128x256xbf16>, vector<16x256xf32> -> vector<16x256xf32>
      %c0_12 = arith.constant 0 : index
      %c0_13 = arith.constant 0 : index
      %24 = vector.load %arg7[%c0_12, %c0_13] : memref<1x256xf32, #tpu.memory_space<vmem>>, vector<1x256xf32>
      %25 = vector.broadcast %24 : vector<1x256xf32> to vector<16x256xf32>
      %26 = arith.addf %23, %25 : vector<16x256xf32>
      %c0_14 = arith.constant 0 : index
      %c0_15 = arith.constant 0 : index
      %27 = vector.load %arg8[%c0_14, %c0_15] : memref<16x256xf32, #tpu.memory_space<vmem>>, vector<16x256xf32>
      tpu.vector_store %arg8[%c0_14, %c0_15], %26 {strides = array<i32>} : memref<16x256xf32, #tpu.memory_space<vmem>>, vector<16x256xf32>,
    } else {
    }
    return
  }
  func.func @transform_0(%arg0: i32, %arg1: i32) -> (i32, i32) {
    %c1_i32 = arith.constant 1 : i32
    %0 = arith.subi %c1_i32, %arg0 : i32
    %1 = arith.muli %arg1, %0 : i32
    %c3_i32 = arith.constant 3 : i32
    %2 = arith.muli %c3_i32, %arg0 : i32
    %3 = arith.addi %1, %2 : i32
    %c0_i32 = arith.constant 0 : i32
    %c0_i32_0 = arith.constant 0 : i32
    return %3, %c0_i32 : i32, i32
  }
  func.func @transform_1(%arg0: i32, %arg1: i32) -> (i32, i32) {
    %c0_i32 = arith.constant 0 : i32
    %c0_i32_0 = arith.constant 0 : i32
    %c0_i32_1 = arith.constant 0 : i32
    return %c0_i32, %c0_i32_0 : i32, i32
  }
  func.func @transform_2(%arg0: i32, %arg1: i32) -> (i32, i32) {
    %c0_i32 = arith.constant 0 : i32
    %c0_i32_0 = arith.constant 0 : i32
    %c0_i32_1 = arith.constant 0 : i32
    return %c0_i32, %c0_i32_0 : i32, i32
  }
  func.func @transform_3(%arg0: i32, %arg1: i32) -> (i32, i32) {
    %c0_i32 = arith.constant 0 : i32
    %c0_i32_0 = arith.constant 0 : i32
    %c0_i32_1 = arith.constant 0 : i32
    return %c0_i32, %c0_i32_0 : i32, i32
  }
  func.func @transform_4(%arg0: i32, %arg1: i32) -> (i32, i32) {
    %c0_i32 = arith.constant 0 : i32
    %c0_i32_0 = arith.constant 0 : i32
    %c0_i32_1 = arith.constant 0 : i32
    return %c0_i32, %c0_i32_0 : i32, i32
  }
  func.func @transform_5(%arg0: i32, %arg1: i32) -> (i32, i32) {
    %c0_i32 = arith.constant 0 : i32
    %c0_i32_0 = arith.constant 0 : i32
    %c0_i32_1 = arith.constant 0 : i32
    return %c0_i32, %c0_i32_0 : i32, i32
  }
  func.func @transform_6(%arg0: i32, %arg1: i32) -> (i32, i32) {
    %0 = arith.muli %arg1, %arg0 : i32
    %c0_i32 = arith.constant 0 : i32
    %c0_i32_0 = arith.constant 0 : i32
    return %0, %c0_i32 : i32, i32
  }
}

module attributes {stable_mosaic.version = 11 : i64} {
  func.func @_pred_mlp_kernel(%arg0: i32, %arg1: i32, %arg2: memref<16x256xf32, #tpu.memory_space<vmem>>, %arg3: memref<256x128xbf16, #tpu.memory_space<vmem>>, %arg4: memref<1x128xf32, #tpu.memory_space<vmem>>, %arg5: memref<1x128xf32, #tpu.memory_space<vmem>>, %arg6: memref<128x256xbf16, #tpu.memory_space<vmem>>, %arg7: memref<1x256xf32, #tpu.memory_space<vmem>>, %arg8: memref<16x256xf32, #tpu.memory_space<vmem>>, %arg9: memref<4x16x128xbf16, #tpu.memory_space<vmem>>, %arg10: memref<1x128xf32, #tpu.memory_space<vmem>>, %arg11: memref<1x128xf32, #tpu.memory_space<vmem>>, %arg12: memref<1x128xf32, #tpu.memory_space<vmem>>, %arg13: memref<1x128xf32, #tpu.memory_space<vmem>>) attributes {dimension_semantics = [#tpu.dimension_semantics<arbitrary>, #tpu.dimension_semantics<arbitrary>], iteration_bounds = array<i64: 2, 4>, scalar_prefetch = 0 : i64, scratch_operands = 5 : i64, tpu.core_type = #tpu.core_type<tc>, window_params = [{transform_indices = @transform_0, window_bounds = array<i64: 16, 256>}, {pipeline_mode = #tpu.pipeline_mode<synchronous>, transform_indices = @transform_1, window_bounds = array<i64: 256, 128>}, {pipeline_mode = #tpu.pipeline_mode<synchronous>, transform_indices = @transform_2, window_bounds = array<i64: 1, 128>}, {pipeline_mode = #tpu.pipeline_mode<synchronous>, transform_indices = @transform_3, window_bounds = array<i64: 1, 128>}, {pipeline_mode = #tpu.pipeline_mode<synchronous>, transform_indices = @transform_4, window_bounds = array<i64: 128, 256>}, {pipeline_mode = #tpu.pipeline_mode<synchronous>, transform_indices = @transform_5, window_bounds = array<i64: 1, 256>}, {transform_indices = @transform_6, window_bounds = array<i64: 16, 256>}]} {
    %c0_i32 = arith.constant 0 : i32
    %0 = arith.cmpi eq, %arg0, %c0_i32 : i32
    %1 = arith.extui %0 : i1 to i32
    %c0_i32_0 = arith.constant 0 : i32
    %2 = arith.cmpi ne, %1, %c0_i32_0 : i32
    scf.if %2 {
      %c0_i32_2 = arith.constant 0 : i32
      %6 = arith.cmpi eq, %arg1, %c0_i32_2 : i32
      %7 = arith.extui %6 : i1 to i32
      %c0_i32_3 = arith.constant 0 : i32
      %8 = arith.cmpi ne, %7, %c0_i32_3 : i32
      scf.if %8 {
        %cst_19 = arith.constant 0.000000e+00 : f32
        %29 = vector.broadcast %cst_19 : f32 to vector<1x128xf32>
        %c0_20 = arith.constant 0 : index
        %c0_21 = arith.constant 0 : index
        %30 = vector.load %arg10[%c0_20, %c0_21] : memref<1x128xf32, #tpu.memory_space<vmem>>, vector<1x128xf32>
        tpu.vector_store %arg10[%c0_20, %c0_21], %29 {strides = array<i32>} : memref<1x128xf32, #tpu.memory_space<vmem>>, vector<1x128xf32>,
        %cst_22 = arith.constant 0.000000e+00 : f32
        %31 = vector.broadcast %cst_22 : f32 to vector<1x128xf32>
        %c0_23 = arith.constant 0 : index
        %c0_24 = arith.constant 0 : index
        %32 = vector.load %arg11[%c0_23, %c0_24] : memref<1x128xf32, #tpu.memory_space<vmem>>, vector<1x128xf32>
        tpu.vector_store %arg11[%c0_23, %c0_24], %31 {strides = array<i32>} : memref<1x128xf32, #tpu.memory_space<vmem>>, vector<1x128xf32>,
      } else {
      }
      %c0 = arith.constant 0 : index
      %c0_4 = arith.constant 0 : index
      %9 = vector.load %arg2[%c0, %c0_4] : memref<16x256xf32, #tpu.memory_space<vmem>>, vector<16x256xf32>
      %10 = arith.truncf %9 : vector<16x256xf32> to vector<16x256xbf16>
      %c0_5 = arith.constant 0 : index
      %c0_6 = arith.constant 0 : index
      %11 = vector.load %arg3[%c0_5, %c0_6] : memref<256x128xbf16, #tpu.memory_space<vmem>>, vector<256x128xbf16>
      %cst = arith.constant dense<0.000000e+00> : vector<16x128xf32>
      %12 = tpu.matmul %10, %11, %cst {dimension_numbers = #tpu.dot_dimension_numbers<[1], [0], [0], [1], [0, 0, 1, 1], [], []>} : vector<16x256xbf16>, vector<256x128xbf16>, vector<16x128xf32> -> vector<16x128xf32>
      %c0_7 = arith.constant 0 : index
      %c0_8 = arith.constant 0 : index
      %13 = vector.load %arg10[%c0_7, %c0_8] : memref<1x128xf32, #tpu.memory_space<vmem>>, vector<1x128xf32>
      %cst_9 = arith.constant dense<0.000000e+00> : vector<128xf32>
      %14 = vector.multi_reduction <add>, %12, %cst_9 [0] : vector<16x128xf32> to vector<128xf32>
      %15 = vector.shape_cast %14 : vector<128xf32> to vector<1x128xf32>
      %16 = arith.addf %13, %15 : vector<1x128xf32>
      %c0_10 = arith.constant 0 : index
      %c0_11 = arith.constant 0 : index
      %17 = vector.load %arg10[%c0_10, %c0_11] : memref<1x128xf32, #tpu.memory_space<vmem>>, vector<1x128xf32>
      tpu.vector_store %arg10[%c0_10, %c0_11], %16 {strides = array<i32>} : memref<1x128xf32, #tpu.memory_space<vmem>>, vector<1x128xf32>,
      %c0_12 = arith.constant 0 : index
      %c0_13 = arith.constant 0 : index
      %18 = vector.load %arg11[%c0_12, %c0_13] : memref<1x128xf32, #tpu.memory_space<vmem>>, vector<1x128xf32>
      %19 = arith.mulf %12, %12 : vector<16x128xf32>
      %cst_14 = arith.constant dense<0.000000e+00> : vector<128xf32>
      %20 = vector.multi_reduction <add>, %19, %cst_14 [0] : vector<16x128xf32> to vector<128xf32>
      %21 = vector.shape_cast %20 : vector<128xf32> to vector<1x128xf32>
      %22 = arith.addf %18, %21 : vector<1x128xf32>
      %c0_15 = arith.constant 0 : index
      %c0_16 = arith.constant 0 : index
      %23 = vector.load %arg11[%c0_15, %c0_16] : memref<1x128xf32, #tpu.memory_space<vmem>>, vector<1x128xf32>
      tpu.vector_store %arg11[%c0_15, %c0_16], %22 {strides = array<i32>} : memref<1x128xf32, #tpu.memory_space<vmem>>, vector<1x128xf32>,
      %24 = arith.truncf %12 : vector<16x128xf32> to vector<16x128xbf16>
      %25 = arith.index_cast %arg1 : i32 to index
      %c0_17 = arith.constant 0 : index
      %c0_18 = arith.constant 0 : index
      %26 = vector.load %arg9[%25, %c0_17, %c0_18] : memref<4x16x128xbf16, #tpu.memory_space<vmem>>, vector<1x16x128xbf16>
      %27 = vector.shape_cast %26 : vector<1x16x128xbf16> to vector<16x128xbf16>
      %28 = vector.shape_cast %24 : vector<16x128xbf16> to vector<1x16x128xbf16>
      tpu.vector_store %arg9[%25, %c0_17, %c0_18], %28 {strides = array<i32>} : memref<4x16x128xbf16, #tpu.memory_space<vmem>>, vector<1x16x128xbf16>,
    } else {
    }
    %c1_i32 = arith.constant 1 : i32
    %3 = arith.cmpi eq, %arg0, %c1_i32 : i32
    %4 = arith.extui %3 : i1 to i32
    %c0_i32_1 = arith.constant 0 : i32
    %5 = arith.cmpi ne, %4, %c0_i32_1 : i32
    scf.if %5 {
      %c0_i32_2 = arith.constant 0 : i32
      %6 = arith.cmpi eq, %arg1, %c0_i32_2 : i32
      %7 = arith.extui %6 : i1 to i32
      %c0_i32_3 = arith.constant 0 : i32
      %8 = arith.cmpi ne, %7, %c0_i32_3 : i32
      scf.if %8 {
        %c0_16 = arith.constant 0 : index
        %c0_17 = arith.constant 0 : index
        %28 = vector.load %arg10[%c0_16, %c0_17] : memref<1x128xf32, #tpu.memory_space<vmem>>, vector<1x128xf32>
        %cst_18 = arith.constant 1.562500e-02 : f32
        %29 = vector.broadcast %cst_18 : f32 to vector<1x128xf32>
        %30 = arith.mulf %28, %29 : vector<1x128xf32>
        %c0_19 = arith.constant 0 : index
        %c0_20 = arith.constant 0 : index
        %31 = vector.load %arg11[%c0_19, %c0_20] : memref<1x128xf32, #tpu.memory_space<vmem>>, vector<1x128xf32>
        %cst_21 = arith.constant 1.562500e-02 : f32
        %32 = vector.broadcast %cst_21 : f32 to vector<1x128xf32>
        %33 = arith.mulf %31, %32 : vector<1x128xf32>
        %34 = arith.mulf %30, %30 : vector<1x128xf32>
        %35 = arith.subf %33, %34 : vector<1x128xf32>
        %cst_22 = arith.constant 0.000000e+00 : f32
        %36 = vector.broadcast %cst_22 : f32 to vector<1x128xf32>
        %37 = arith.maximumf %35, %36 : vector<1x128xf32>
        %c0_23 = arith.constant 0 : index
        %c0_24 = arith.constant 0 : index
        %38 = vector.load %arg4[%c0_23, %c0_24] : memref<1x128xf32, #tpu.memory_space<vmem>>, vector<1x128xf32>
        %cst_25 = arith.constant 9.99999974E-6 : f32
        %39 = vector.broadcast %cst_25 : f32 to vector<1x128xf32>
        %40 = arith.addf %37, %39 : vector<1x128xf32>
        %41 = math.rsqrt %40 : vector<1x128xf32>
        %42 = arith.mulf %38, %41 : vector<1x128xf32>
        %c0_26 = arith.constant 0 : index
        %c0_27 = arith.constant 0 : index
        %43 = vector.load %arg12[%c0_26, %c0_27] : memref<1x128xf32, #tpu.memory_space<vmem>>, vector<1x128xf32>
        tpu.vector_store %arg12[%c0_26, %c0_27], %42 {strides = array<i32>} : memref<1x128xf32, #tpu.memory_space<vmem>>, vector<1x128xf32>,
        %c0_28 = arith.constant 0 : index
        %c0_29 = arith.constant 0 : index
        %44 = vector.load %arg5[%c0_28, %c0_29] : memref<1x128xf32, #tpu.memory_space<vmem>>, vector<1x128xf32>
        %45 = arith.mulf %30, %42 : vector<1x128xf32>
        %46 = arith.subf %44, %45 : vector<1x128xf32>
        %c0_30 = arith.constant 0 : index
        %c0_31 = arith.constant 0 : index
        %47 = vector.load %arg13[%c0_30, %c0_31] : memref<1x128xf32, #tpu.memory_space<vmem>>, vector<1x128xf32>
        tpu.vector_store %arg13[%c0_30, %c0_31], %46 {strides = array<i32>} : memref<1x128xf32, #tpu.memory_space<vmem>>, vector<1x128xf32>,
      } else {
      }
      %9 = arith.index_cast %arg1 : i32 to index
      %c0 = arith.constant 0 : index
      %c0_4 = arith.constant 0 : index
      %10 = vector.load %arg9[%9, %c0, %c0_4] : memref<4x16x128xbf16, #tpu.memory_space<vmem>>, vector<1x16x128xbf16>
      %11 = vector.shape_cast %10 : vector<1x16x128xbf16> to vector<16x128xbf16>
      %12 = arith.extf %11 : vector<16x128xbf16> to vector<16x128xf32>
      %c0_5 = arith.constant 0 : index
      %c0_6 = arith.constant 0 : index
      %13 = vector.load %arg12[%c0_5, %c0_6] : memref<1x128xf32, #tpu.memory_space<vmem>>, vector<1x128xf32>
      %14 = vector.broadcast %13 : vector<1x128xf32> to vector<16x128xf32>
      %15 = arith.mulf %12, %14 : vector<16x128xf32>
      %c0_7 = arith.constant 0 : index
      %c0_8 = arith.constant 0 : index
      %16 = vector.load %arg13[%c0_7, %c0_8] : memref<1x128xf32, #tpu.memory_space<vmem>>, vector<1x128xf32>
      %17 = vector.broadcast %16 : vector<1x128xf32> to vector<16x128xf32>
      %18 = arith.addf %15, %17 : vector<16x128xf32>
      %cst = arith.constant 0.000000e+00 : f32
      %19 = vector.broadcast %cst : f32 to vector<16x128xf32>
      %20 = arith.maximumf %18, %19 : vector<16x128xf32>
      %21 = arith.truncf %20 : vector<16x128xf32> to vector<16x128xbf16>
      %c0_9 = arith.constant 0 : index
      %c0_10 = arith.constant 0 : index
      %22 = vector.load %arg6[%c0_9, %c0_10] : memref<128x256xbf16, #tpu.memory_space<vmem>>, vector<128x256xbf16>
      %cst_11 = arith.constant dense<0.000000e+00> : vector<16x256xf32>
      %23 = tpu.matmul %21, %22, %cst_11 {dimension_numbers = #tpu.dot_dimension_numbers<[1], [0], [0], [1], [0, 0, 1, 1], [], []>} : vector<16x128xbf16>, vector<128x256xbf16>, vector<16x256xf32> -> vector<16x256xf32>
      %c0_12 = arith.constant 0 : index
      %c0_13 = arith.constant 0 : index
      %24 = vector.load %arg7[%c0_12, %c0_13] : memref<1x256xf32, #tpu.memory_space<vmem>>, vector<1x256xf32>
      %25 = vector.broadcast %24 : vector<1x256xf32> to vector<16x256xf32>
      %26 = arith.addf %23, %25 : vector<16x256xf32>
      %c0_14 = arith.constant 0 : index
      %c0_15 = arith.constant 0 : index
      %27 = vector.load %arg8[%c0_14, %c0_15] : memref<16x256xf32, #tpu.memory_space<vmem>>, vector<16x256xf32>
      tpu.vector_store %arg8[%c0_14, %c0_15], %26 {strides = array<i32>} : memref<16x256xf32, #tpu.memory_space<vmem>>, vector<16x256xf32>,
    } else {
    }
    return
  }
  func.func @transform_0(%arg0: i32, %arg1: i32) -> (i32, i32) {
    %c1_i32 = arith.constant 1 : i32
    %0 = arith.subi %c1_i32, %arg0 : i32
    %1 = arith.muli %arg1, %0 : i32
    %c3_i32 = arith.constant 3 : i32
    %2 = arith.muli %c3_i32, %arg0 : i32
    %3 = arith.addi %1, %2 : i32
    %c0_i32 = arith.constant 0 : i32
    %c0_i32_0 = arith.constant 0 : i32
    return %3, %c0_i32 : i32, i32
  }
  func.func @transform_1(%arg0: i32, %arg1: i32) -> (i32, i32) {
    %c0_i32 = arith.constant 0 : i32
    %c0_i32_0 = arith.constant 0 : i32
    %c0_i32_1 = arith.constant 0 : i32
    return %c0_i32, %c0_i32_0 : i32, i32
  }
  func.func @transform_2(%arg0: i32, %arg1: i32) -> (i32, i32) {
    %c0_i32 = arith.constant 0 : i32
    %c0_i32_0 = arith.constant 0 : i32
    %c0_i32_1 = arith.constant 0 : i32
    return %c0_i32, %c0_i32_0 : i32, i32
  }
  func.func @transform_3(%arg0: i32, %arg1: i32) -> (i32, i32) {
    %c0_i32 = arith.constant 0 : i32
    %c0_i32_0 = arith.constant 0 : i32
    %c0_i32_1 = arith.constant 0 : i32
    return %c0_i32, %c0_i32_0 : i32, i32
  }
  func.func @transform_4(%arg0: i32, %arg1: i32) -> (i32, i32) {
    %c0_i32 = arith.constant 0 : i32
    %c0_i32_0 = arith.constant 0 : i32
    %c0_i32_1 = arith.constant 0 : i32
    return %c0_i32, %c0_i32_0 : i32, i32
  }
  func.func @transform_5(%arg0: i32, %arg1: i32) -> (i32, i32) {
    %c0_i32 = arith.constant 0 : i32
    %c0_i32_0 = arith.constant 0 : i32
    %c0_i32_1 = arith.constant 0 : i32
    return %c0_i32, %c0_i32_0 : i32, i32
  }
  func.func @transform_6(%arg0: i32, %arg1: i32) -> (i32, i32) {
    %0 = arith.muli %arg1, %arg0 : i32
    %c0_i32 = arith.constant 0 : i32
    %c0_i32_0 = arith.constant 0 : i32
    return %0, %c0_i32 : i32, i32
  }
}

</mosaic_0001>

<llo_original>
// kernel: tpu_custom_call.1
$region0: #{tpu_custom_call.1}
  #allocation0 [shape = 'u32[]', space=smem, size = 0x4, offset = 0x4, fixed_abs, tag = 'smem constant byte address 0x4 - core index']
  #allocation1 [shape = 'u32[144,128]{1,0:T(1,128)}', space=vmem, size = 0x12000, scoped, tag = 'internal scratch']
  #allocation2 [shape = 'bf16[4,16,128]{2,1,0:T(8,128)(2,1)}', space=vmem, size = 0x4000, scoped, tag = 'scratch operand']
  #allocation3 [shape = 'f32[1,128]{1,0:T(1,128)}', space=vmem, size = 0x200, scoped, tag = 'scratch operand']
  #allocation4 [shape = 'f32[1,128]{1,0:T(1,128)}', space=vmem, size = 0x200, scoped, tag = 'scratch operand']
  #allocation5 [shape = 'f32[1,128]{1,0:T(1,128)}', space=vmem, size = 0x200, scoped, tag = 'scratch operand']
  #allocation6 [shape = 'f32[1,128]{1,0:T(1,128)}', space=vmem, size = 0x200, scoped, tag = 'scratch operand']
  %s0 = inlined_call_operand.hbm [shape: f32[64,256], index: 0, kind: input, shape index: {}]
  %s1 = inlined_call_operand.hbm [shape: bf16[256,128], index: 1, kind: input, shape index: {}]
  %s2 = inlined_call_operand.vmem [shape: f32[1,128], index: 2, kind: input, shape index: {}]
  %s3 = inlined_call_operand.vmem [shape: f32[1,128], index: 3, kind: input, shape index: {}]
  %s4 = inlined_call_operand.hbm [shape: bf16[128,256], index: 4, kind: input, shape index: {}]
  %s5 = inlined_call_operand.vmem [shape: f32[1,256], index: 5, kind: input, shape index: {}]
  %s6 = inlined_call_operand.hbm [shape: f32[64,256], index: 6, kind: output, shape index: {}]
  %s7 = sld [smem:[#allocation0]]
  $region85: #{tpu_custom_call.1} parent=0
    _
  %s9 = ssub.s32 1, %s7
  %s10 = scalar_select 0, %s9, %s7
  $region1: #{tpu_custom_call.1} parent=0
    #allocation7 [shape = 'u8[32768]{0}', space=vmem, size = 0x8000, scoped, tag = 'input window, operand 0']
    #allocation8 [shape = 's32[2]{0}', space=sflag, size = 0x8, scoped, tag = 'scoped memory for tpu_custom_call.1']
    #allocation9 [shape = 's32[2]{0}', space=sflag, size = 0x8, scoped, tag = 'scoped memory for tpu_custom_call.1']
    #allocation10 [shape = 'u8[65536]{0}', space=vmem, size = 0x10000, scoped, tag = 'input window, operand 1, single buffered']
    #allocation11 [shape = 's32[1]{0}', space=sflag, size = 0x4, scoped, tag = 'scoped memory for tpu_custom_call.1']
    #allocation12 [shape = 'u8[65536]{0}', space=vmem, size = 0x10000, scoped, tag = 'input window, operand 4, single buffered']
    #allocation13 [shape = 'u8[32768]{0}', space=vmem, size = 0x8000, scoped, tag = 'output window, operand 0']
    %11 = vsyncpa [#allocation8], 0
    %s12 = scalar_lea.sflag [#allocation8], 1
    %13 = vsyncpa %s12, 0
    %14 = vsyncpa [#allocation11], 0
    %15 = vsyncpa [#allocation9], 0
    %s16 = scalar_lea.sflag [#allocation9], 1
    %17 = vsyncpa %s16, 0
    loop: start=0, step=1, limit=10
    $region2: #{tpu_custom_call.1} parent=1 // loop_pre_header
      _
    $region3: #{tpu_custom_call.1} parent=1 // loop_header
      %s19 = sphi 0, %s23
      %p20 = scmp.ge.s32.totalorder %s19, 10
      %s26 = sphi 0, %s38
      %s27 = sphi 0, %s34
      %s28 = sphi 0, %s26
      %s29 = sphi 0, %s27
      %s30 = sphi 0, %s28
      %s31 = sphi 0, %s29
      %s49 = sphi 0, %s51
      %s52 = sphi 0, %s49
      %s53 = sphi 0, %s52
      %s69 = sphi 0, %s53
      %s73 = sphi 0, %s73
      %s75 = sphi 0, %s73
      %s76 = sphi 0, %s75
      %s90 = sphi 0, %s76
      %s94 = sphi 0, %s94
      %s96 = sphi 0, %s94
      %s97 = sphi 0, %s96
      %s111 = sphi 0, %s97
      %s115 = sphi 0, %s115
      %s117 = sphi 0, %s115
      %s118 = sphi 0, %s117
      %s132 = sphi 0, %s118
      %s136 = sphi 0, %s136
      %s138 = sphi 0, %s136
      %s139 = sphi 0, %s138
      %s153 = sphi 0, %s139
      %s157 = sphi 0, %s157
      %s159 = sphi 0, %s157
      %s160 = sphi 0, %s159
      %s174 = sphi 0, %s160
      %s182 = sphi 0, %s184
      %s185 = sphi 0, %s182
      %s186 = sphi 0, %s185
      %s202 = sphi 0, %s186
    $region4: #{tpu_custom_call.1} parent=1 // loop_header_branch
      %22 = sbr.rel (%p20) target = $region8
    $region5: #{tpu_custom_call.1} parent=1 // loop_body
      %s24 = ssub.s32 %s19, 1
      %s25 = ssub.s32 %s19, 2
      %s32 = sadd.s32 1, %s27
      %p33 = scmp.ge.s32.totalorder %s32, 4
      %s34 = scalar_select %p33, 0, %s32
      %s35 = sadd.s32 1, %s26
      %s36 = scalar_select %p33, %s35, %s26
      %p37 = scmp.ge.s32.totalorder %s36, 2
      %s38 = scalar_select %p37, 0, %s36
      %s39 = ssub.s32 1, %s26
      %s40 = smul.u32 %s27, %s39
      %s41 = smul.u32 %s26, 3
      %s42 = sadd.s32 %s40, %s41
      %s43 = ssub.s32 1, %s38
      %s44 = smul.u32 %s34, %s43
      %s45 = smul.u32 %s38, 3
      %s46 = sadd.s32 %s44, %s45
      %s47 = ssub.s32 %s42, %s46
      %p48 = scmp.eq.s32.totalorder %s47, 0
      %s50 = sadd.s32 %s49, 1
      %s51 = scalar_select %p48, %s49, %s50
      %p54 = pneg %p48
      %p55 = scmp.eq.s32.totalorder %s19, 7
      %p56 = por %p54, %p55
      %p57 = scmp.ne.s32.totalorder %s49, %s52
      %p58 = scmp.eq.s32.totalorder %s19, 0
      %p59 = por %p57, %p58
      %p60 = scmp.ne.s32.totalorder %s49, %s52
      %p61 = scmp.eq.s32.totalorder %s24, 7
      %p62 = por %p60, %p61
      %p63 = scmp.ne.s32.totalorder %s52, %s53
      %p64 = scmp.eq.s32.totalorder %s24, 0
      %p65 = por %p63, %p64
      %p66 = scmp.ne.s32.totalorder %s52, %s53
      %p67 = scmp.eq.s32.totalorder %s25, 7
      %p68 = por %p66, %p67
      %p70 = scmp.ne.s32.totalorder %s53, %s69
      %p71 = scmp.eq.s32.totalorder %s25, 0
      %p72 = por %p70, %p71
      %s74 = sadd.s32 %s73, 1
      %p77 = scmp.eq.s32.totalorder %s19, 7
      %p78 = scmp.ne.s32.totalorder %s73, %s75
      %p79 = scmp.eq.s32.totalorder %s19, 0
      %p80 = por %p78, %p79
      %p81 = scmp.ne.s32.totalorder %s73, %s75
      %p82 = scmp.eq.s32.totalorder %s24, 7
      %p83 = por %p81, %p82
      %p84 = scmp.ne.s32.totalorder %s75, %s76
      %p85 = scmp.eq.s32.totalorder %s24, 0
      %p86 = por %p84, %p85
      %p87 = scmp.ne.s32.totalorder %s75, %s76
      %p88 = scmp.eq.s32.totalorder %s25, 7
      %p89 = por %p87, %p88
      %p91 = scmp.ne.s32.totalorder %s76, %s90
      %p92 = scmp.eq.s32.totalorder %s25, 0
      %p93 = por %p91, %p92
      %s95 = sadd.s32 %s94, 1
      %p98 = scmp.eq.s32.totalorder %s19, 7
      %p99 = scmp.ne.s32.totalorder %s94, %s96
      %p100 = scmp.eq.s32.totalorder %s19, 0
      %p101 = por %p99, %p100
      %p102 = scmp.ne.s32.totalorder %s94, %s96
      %p103 = scmp.eq.s32.totalorder %s24, 7
      %p104 = por %p102, %p103
      %p105 = scmp.ne.s32.totalorder %s96, %s97
      %p106 = scmp.eq.s32.totalorder %s24, 0
      %p107 = por %p105, %p106
      %p108 = scmp.ne.s32.totalorder %s96, %s97
      %p109 = scmp.eq.s32.totalorder %s25, 7
      %p110 = por %p108, %p109
      %p112 = scmp.ne.s32.totalorder %s97, %s111
      %p113 = scmp.eq.s32.totalorder %s25, 0
      %p114 = por %p112, %p113
      %s116 = sadd.s32 %s115, 1
      %p119 = scmp.eq.s32.totalorder %s19, 7
      %p120 = scmp.ne.s32.totalorder %s115, %s117
      %p121 = scmp.eq.s32.totalorder %s19, 0
      %p122 = por %p120, %p121
      %p123 = scmp.ne.s32.totalorder %s115, %s117
      %p124 = scmp.eq.s32.totalorder %s24, 7
      %p125 = por %p123, %p124
      %p126 = scmp.ne.s32.totalorder %s117, %s118
      %p127 = scmp.eq.s32.totalorder %s24, 0
      %p128 = por %p126, %p127
      %p129 = scmp.ne.s32.totalorder %s117, %s118
      %p130 = scmp.eq.s32.totalorder %s25, 7
      %p131 = por %p129, %p130
      %p133 = scmp.ne.s32.totalorder %s118, %s132
      %p134 = scmp.eq.s32.totalorder %s25, 0
      %p135 = por %p133, %p134
      %s137 = sadd.s32 %s136, 1
      %p140 = scmp.eq.s32.totalorder %s19, 7
      %p141 = scmp.ne.s32.totalorder %s136, %s138
      %p142 = scmp.eq.s32.totalorder %s19, 0
      %p143 = por %p141, %p142
      %p144 = scmp.ne.s32.totalorder %s136, %s138
      %p145 = scmp.eq.s32.totalorder %s24, 7
      %p146 = por %p144, %p145
      %p147 = scmp.ne.s32.totalorder %s138, %s139
      %p148 = scmp.eq.s32.totalorder %s24, 0
      %p149 = por %p147, %p148
      %p150 = scmp.ne.s32.totalorder %s138, %s139
      %p151 = scmp.eq.s32.totalorder %s25, 7
      %p152 = por %p150, %p151
      %p154 = scmp.ne.s32.totalorder %s139, %s153
      %p155 = scmp.eq.s32.totalorder %s25, 0
      %p156 = por %p154, %p155
      %s158 = sadd.s32 %s157, 1
      %p161 = scmp.eq.s32.totalorder %s19, 7
      %p162 = scmp.ne.s32.totalorder %s157, %s159
      %p163 = scmp.eq.s32.totalorder %s19, 0
      %p164 = por %p162, %p163
      %p165 = scmp.ne.s32.totalorder %s157, %s159
      %p166 = scmp.eq.s32.totalorder %s24, 7
      %p167 = por %p165, %p166
      %p168 = scmp.ne.s32.totalorder %s159, %s160
      %p169 = scmp.eq.s32.totalorder %s24, 0
      %p170 = por %p168, %p169
      %p171 = scmp.ne.s32.totalorder %s159, %s160
      %p172 = scmp.eq.s32.totalorder %s25, 7
      %p173 = por %p171, %p172
      %p175 = scmp.ne.s32.totalorder %s160, %s174
      %p176 = scmp.eq.s32.totalorder %s25, 0
      %p177 = por %p175, %p176
      %s178 = smul.u32 %s27, %s26
      %s179 = smul.u32 %s34, %s38
      %s180 = ssub.s32 %s178, %s179
      %p181 = scmp.eq.s32.totalorder %s180, 0
      %s183 = sadd.s32 %s182, 1
      %s184 = scalar_select %p181, %s182, %s183
      %p187 = pneg %p181
      %p188 = scmp.eq.s32.totalorder %s19, 7
      %p189 = por %p187, %p188
      %p190 = scmp.ne.s32.totalorder %s182, %s185
      %p191 = scmp.eq.s32.totalorder %s19, 0
      %p192 = por %p190, %p191
      %p193 = scmp.ne.s32.totalorder %s182, %s185
      %p194 = scmp.eq.s32.totalorder %s24, 7
      %p195 = por %p193, %p194
      %p196 = scmp.ne.s32.totalorder %s185, %s186
      %p197 = scmp.eq.s32.totalorder %s24, 0
      %p198 = por %p196, %p197
      %p199 = scmp.ne.s32.totalorder %s185, %s186
      %p200 = scmp.eq.s32.totalorder %s25, 7
      %p201 = por %p199, %p200
      %p203 = scmp.ne.s32.totalorder %s186, %s202
      %p204 = scmp.eq.s32.totalorder %s25, 0
      %p205 = por %p203, %p204
      %p206 = scmp.le.s32.totalorder 1, %s19
      %p207 = scmp.lt.s32.totalorder %s19, 9
      %p208 = pnand %p206, %p207
      %p209 = pneg %p208
      // Predicated region
      $region9: #{tpu_custom_call.1} parent=5 // pred_check
        _
      $region10: #{tpu_custom_call.1} parent=5 // pred_check_branch
        %211 = sbr.rel (%p208) target = $region12
      $region11: #{tpu_custom_call.1} parent=5 // pred_region
        %s212 = ssub.s32 %s19, 1
        // Predicated region
        $region13: #{tpu_custom_call.1} parent=11 // pred_check
          %p213 = pneg %p86
        $region14: #{tpu_custom_call.1} parent=11 // pred_check_branch
          %215 = sbr.rel (%p213) target = $region16
        $region15: #{tpu_custom_call.1} parent=11 // pred_region
          %s217 = ssub.s32 2048, 2048
          %218 = vsyncadd [#allocation11], %s217
          %s219 = sshll.u32 [#allocation10], 4
          %s220 = int_to_ptr.vmem [resolvable:$true] %s219
          %225 = dma.hbm_to_vmem [thread:$0]  %s1, 2048, %s220, [#allocation11], 64, 64, 4
        $region16: #{tpu_custom_call.1} parent=11 // pred_fallthru
          _
        // Predicated region
        $region17: #{tpu_custom_call.1} parent=11 // pred_check
          %p226 = pneg %p107
        $region18: #{tpu_custom_call.1} parent=11 // pred_check_branch
          %228 = sbr.rel (%p226) target = $region20
        $region19: #{tpu_custom_call.1} parent=11 // pred_region
          _
        $region20: #{tpu_custom_call.1} parent=11 // pred_fallthru
          _
        // Predicated region
        $region21: #{tpu_custom_call.1} parent=11 // pred_check
          %p229 = pneg %p128
        $region22: #{tpu_custom_call.1} parent=11 // pred_check_branch
          %231 = sbr.rel (%p229) target = $region24
        $region23: #{tpu_custom_call.1} parent=11 // pred_region
          _
        $region24: #{tpu_custom_call.1} parent=11 // pred_fallthru
          _
        // Predicated region
        $region25: #{tpu_custom_call.1} parent=11 // pred_check
          %p232 = pneg %p149
        $region26: #{tpu_custom_call.1} parent=11 // pred_check_branch
          %234 = sbr.rel (%p232) target = $region28
        $region27: #{tpu_custom_call.1} parent=11 // pred_region
          %s236 = ssub.s32 2048, 2048
          %237 = vsyncadd [#allocation11], %s236
          %s238 = sshll.u32 [#allocation12], 4
          %s239 = int_to_ptr.vmem [resolvable:$true] %s238
          %244 = dma.hbm_to_vmem [thread:$0]  %s4, 2048, %s239, [#allocation11], 128, 128, 8
        $region28: #{tpu_custom_call.1} parent=11 // pred_fallthru
          _
        // Predicated region
        $region29: #{tpu_custom_call.1} parent=11 // pred_check
          %p245 = pneg %p170
        $region30: #{tpu_custom_call.1} parent=11 // pred_check_branch
          %247 = sbr.rel (%p245) target = $region32
        $region31: #{tpu_custom_call.1} parent=11 // pred_region
          _
        $region32: #{tpu_custom_call.1} parent=11 // pred_fallthru
          _
      $region12: #{tpu_custom_call.1} parent=5 // pred_fallthru
        _
      %p248 = scmp.lt.s32.totalorder %s19, 8
      // Predicated region
      $region33: #{tpu_custom_call.1} parent=5 // pred_check
        %p249 = pneg %p248
      $region34: #{tpu_custom_call.1} parent=5 // pred_check_branch
        %251 = sbr.rel (%p249) target = $region36
      $region35: #{tpu_custom_call.1} parent=5 // pred_region
        // Predicated region
        $region37: #{tpu_custom_call.1} parent=35 // pred_check
          %p252 = pneg %p59
        $region38: #{tpu_custom_call.1} parent=35 // pred_check_branch
          %254 = sbr.rel (%p252) target = $region40
        $region39: #{tpu_custom_call.1} parent=35 // pred_region
          %s255 = sand.u32 %s49, 1
          %s256 = scalar_lea.sflag [#allocation8], %s255
          %s257 = sand.u32 %s49, 1
          %s258 = smul.addr %s257, 32
          %s259 = scalar_lea.vmem [#allocation7], %s258
          %s260 = ssub.s32 1, %s26
          %s261 = smul.u32 %s27, %s260
          %s262 = smul.u32 %s26, 3
          %s263 = sadd.s32 %s261, %s262
          %s264 = smul.u32 2, %s263
          %s266 = ssub.s32 512, 512
          %267 = vsyncadd %s256, %s266
          %s268 = smul.addr %s264, 2
          %s269 = smul.addr %s268, 128
          %s270 = scalar_lea.hbm %s0, %s269
          %s271 = sshll.u32 %s259, 4
          %s272 = int_to_ptr.vmem [resolvable:$true] %s271
          %277 = dma.hbm_to_vmem [thread:$0]  %s270, 512, %s272, %s256, 256, 256, 16
        $region40: #{tpu_custom_call.1} parent=35 // pred_fallthru
          _
      $region36: #{tpu_custom_call.1} parent=5 // pred_fallthru
        _
      %p278 = scmp.le.s32.totalorder 1, %s19
      %p279 = scmp.lt.s32.totalorder %s19, 9
      %p280 = pnand %p278, %p279
      %p281 = pneg %p280
      // Predicated region
      $region41: #{tpu_custom_call.1} parent=5 // pred_check
        _
      $region42: #{tpu_custom_call.1} parent=5 // pred_check_branch
        %283 = sbr.rel (%p280) target = $region44
      $region43: #{tpu_custom_call.1} parent=5 // pred_region
        %s284 = ssub.s32 %s19, 1
        %s285 = sand.u32 %s52, 1
        %s286 = scalar_lea.sflag [#allocation8], %s285
        %s287 = sand.u32 %s52, 1
        %s288 = smul.addr %s287, 32
        %s289 = scalar_lea.vmem [#allocation7], %s288
        // Predicated region
        $region45: #{tpu_custom_call.1} parent=43 // pred_check
          %p290 = pneg %p65
        $region46: #{tpu_custom_call.1} parent=43 // pred_check_branch
          %292 = sbr.rel (%p290) target = $region48
        $region47: #{tpu_custom_call.1} parent=43 // pred_region
          %293 = dma.done %s286, 512
        $region48: #{tpu_custom_call.1} parent=43 // pred_fallthru
          _
        // Predicated region
        $region49: #{tpu_custom_call.1} parent=43 // pred_check
          %p294 = pneg %p86
        $region50: #{tpu_custom_call.1} parent=43 // pred_check_branch
          %296 = sbr.rel (%p294) target = $region52
        $region51: #{tpu_custom_call.1} parent=43 // pred_region
          %297 = dma.done [#allocation11], 2048
        $region52: #{tpu_custom_call.1} parent=43 // pred_fallthru
          _
        // Predicated region
        $region53: #{tpu_custom_call.1} parent=43 // pred_check
          %p298 = pneg %p149
        $region54: #{tpu_custom_call.1} parent=43 // pred_check_branch
          %300 = sbr.rel (%p298) target = $region56
        $region55: #{tpu_custom_call.1} parent=43 // pred_region
          %301 = dma.done [#allocation11], 2048
        $region56: #{tpu_custom_call.1} parent=43 // pred_fallthru
          _
        %s302 = sand.u32 %s52, 1
        %s303 = scalar_lea.sflag [#allocation8], %s302
        %s304 = sand.u32 %s52, 1
        %s305 = smul.addr %s304, 32
        %s306 = scalar_lea.vmem [#allocation7], %s305
        %p307 = pneg %p65
        %p308 = pneg %p62
        %p309 = pneg %p86
        %p310 = pneg %p83
        %p311 = pneg %p107
        %p312 = pneg %p104
        %p313 = pneg %p128
        %p314 = pneg %p125
        %p315 = pneg %p149
        %p316 = pneg %p146
        %p317 = pneg %p170
        %p318 = pneg %p167
        %p319 = pneg %p198
        %p320 = pneg %p195
        %s321 = sand.u32 %s185, 1
        %s322 = scalar_lea.sflag [#allocation9], %s321
        %s323 = sand.u32 %s185, 1
        %s324 = smul.addr %s323, 32
        %s325 = scalar_lea.vmem [#allocation13], %s324
        %s326 = ssub.s32 1, %s28
        %s327 = smul.u32 %s29, %s326
        %s328 = smul.u32 %s28, 3
        %s329 = sadd.s32 %s327, %s328
        %s330 = smul.u32 2, %s329
        %s331 = smul.u32 %s29, %s28
        %s332 = smul.u32 2, %s331
        %p334 = scmp.eq.s32.totalorder %s28, 0
        // Predicated region
        $region57: #{tpu_custom_call.1} parent=43 // pred_check
          %p335 = pneg %p334
        $region58: #{tpu_custom_call.1} parent=43 // pred_check_branch
          %337 = sbr.rel (%p335) target = $region60
        $region59: #{tpu_custom_call.1} parent=43 // pred_region
          %p338 = scmp.eq.s32.totalorder %s29, 0
          // Predicated region
          $region61: #{tpu_custom_call.1} parent=59 // pred_check
            %p339 = pneg %p338
          $region62: #{tpu_custom_call.1} parent=59 // pred_check_branch
            %341 = sbr.rel (%p339) target = $region64
          $region63: #{tpu_custom_call.1} parent=59 // pred_region
            %342 = vst [vmem:[#allocation3] sm:$0x1] 0.0
            %343 = vst [vmem:[#allocation4] sm:$0x1] 0.0
          $region64: #{tpu_custom_call.1} parent=59 // pred_fallthru
            _
          %v344 = vld [vmem:[%s289] sm:$0xff]
          %v345 = vld [vmem:[%s289 + $0x8] sm:$0xff]
          %v346 = vld [vmem:[%s289 + $0x10] sm:$0xff]
          %v347 = vld [vmem:[%s289 + $0x18] sm:$0xff]
          %v348 = vpack.c.bf16 %v346, %v344
          %v349 = vpack.c.bf16 %v347, %v345
          %v350 = vld [vmem:[#allocation10] sm:$0xf]
          %v351 = vld [vmem:[#allocation10 + $0x4] sm:$0xf]
          %v352 = vld [vmem:[#allocation10 + $0x8] sm:$0xf]
          %v353 = vld [vmem:[#allocation10 + $0xc] sm:$0xf]
          %v354 = vld [vmem:[#allocation10 + $0x10] sm:$0xf]
          %v355 = vld [vmem:[#allocation10 + $0x14] sm:$0xf]
          %v356 = vld [vmem:[#allocation10 + $0x18] sm:$0xf]
          %v357 = vld [vmem:[#allocation10 + $0x1c] sm:$0xf]
          %v358 = vld [vmem:[#allocation10 + $0x20] sm:$0xf]
          %v359 = vld [vmem:[#allocation10 + $0x24] sm:$0xf]
          %v360 = vld [vmem:[#allocation10 + $0x28] sm:$0xf]
          %v361 = vld [vmem:[#allocation10 + $0x2c] sm:$0xf]
          %v362 = vld [vmem:[#allocation10 + $0x30] sm:$0xf]
          %v363 = vld [vmem:[#allocation10 + $0x34] sm:$0xf]
          %v364 = vld [vmem:[#allocation10 + $0x38] sm:$0xf]
          %v365 = vld [vmem:[#allocation10 + $0x3c] sm:$0xf]
          %v366 = vld [vmem:[#allocation10 + $0x40] sm:$0xf]
          %v367 = vld [vmem:[#allocation10 + $0x44] sm:$0xf]
          %v368 = vld [vmem:[#allocation10 + $0x48] sm:$0xf]
          %v369 = vld [vmem:[#allocation10 + $0x4c] sm:$0xf]
          %v370 = vld [vmem:[#allocation10 + $0x50] sm:$0xf]
          %v371 = vld [vmem:[#allocation10 + $0x54] sm:$0xf]
          %v372 = vld [vmem:[#allocation10 + $0x58] sm:$0xf]
          %v373 = vld [vmem:[#allocation10 + $0x5c] sm:$0xf]
          %v374 = vld [vmem:[#allocation10 + $0x60] sm:$0xf]
          %v375 = vld [vmem:[#allocation10 + $0x64] sm:$0xf]
          %v376 = vld [vmem:[#allocation10 + $0x68] sm:$0xf]
          %v377 = vld [vmem:[#allocation10 + $0x6c] sm:$0xf]
          %v378 = vld [vmem:[#allocation10 + $0x70] sm:$0xf]
          %v379 = vld [vmem:[#allocation10 + $0x74] sm:$0xf]
          %v380 = vld [vmem:[#allocation10 + $0x78] sm:$0xf]
          %v381 = vld [vmem:[#allocation10 + $0x7c] sm:$0xf]
          %v414 = vunpack.c.l.b16 %v350
          %v415 = vunpack.c.l.b16 %v351
          %v416 = vunpack.c.l.b16 %v352
          %v417 = vunpack.c.l.b16 %v353
          %v418 = vunpack.c.l.b16 %v354
          %v419 = vunpack.c.l.b16 %v355
          %v420 = vunpack.c.l.b16 %v356
          %v421 = vunpack.c.l.b16 %v357
          %v422 = vunpack.c.l.b16 %v358
          %v423 = vunpack.c.l.b16 %v359
          %v424 = vunpack.c.l.b16 %v360
          %v425 = vunpack.c.l.b16 %v361
          %v426 = vunpack.c.l.b16 %v362
          %v427 = vunpack.c.l.b16 %v363
          %v428 = vunpack.c.l.b16 %v364
          %v429 = vunpack.c.l.b16 %v365
          %v430 = vunpack.c.l.b16 %v366
          %v431 = vunpack.c.l.b16 %v367
          %v432 = vunpack.c.l.b16 %v368
          %v433 = vunpack.c.l.b16 %v369
          %v434 = vunpack.c.l.b16 %v370
          %v435 = vunpack.c.l.b16 %v371
          %v436 = vunpack.c.l.b16 %v372
          %v437 = vunpack.c.l.b16 %v373
          %v438 = vunpack.c.l.b16 %v374
          %v439 = vunpack.c.l.b16 %v375
          %v440 = vunpack.c.l.b16 %v376
          %v441 = vunpack.c.l.b16 %v377
          %v442 = vunpack.c.l.b16 %v378
          %v443 = vunpack.c.l.b16 %v379
          %v444 = vunpack.c.l.b16 %v380
          %v445 = vunpack.c.l.b16 %v381
          %v446 = vpack.c.b16 %v415, %v414
          %v447 = vpack.c.b16 %v417, %v416
          %v448 = vpack.c.b16 %v419, %v418
          %v449 = vpack.c.b16 %v421, %v420
          %v450 = vpack.c.b16 %v423, %v422
          %v451 = vpack.c.b16 %v425, %v424
          %v452 = vpack.c.b16 %v427, %v426
          %v453 = vpack.c.b16 %v429, %v428
          %v454 = vpack.c.b16 %v431, %v430
          %v455 = vpack.c.b16 %v433, %v432
          %v456 = vpack.c.b16 %v435, %v434
          %v457 = vpack.c.b16 %v437, %v436
          %v458 = vpack.c.b16 %v439, %v438
          %v459 = vpack.c.b16 %v441, %v440
          %v460 = vpack.c.b16 %v443, %v442
          %v461 = vpack.c.b16 %v445, %v444
          %478 = vmatprep.subr.bf16.mxu0 0
          %479 = vmatpush1.bf16.msra.mxu0 %v453
          %480 = vmatprep.subr.bf16.mxu0 0
          %481 = vmatpush1.bf16.msra.mxu0 %v452
          %482 = vmatprep.subr.bf16.mxu0 0
          %483 = vmatpush1.bf16.msra.mxu0 %v451
          %484 = vmatprep.subr.bf16.mxu0 0
          %485 = vmatpush1.bf16.msra.mxu0 %v450
          %486 = vmatprep.subr.bf16.mxu0 0
          %487 = vmatpush1.bf16.msra.mxu0 %v449
          %488 = vmatprep.subr.bf16.mxu0 0
          %489 = vmatpush1.bf16.msra.mxu0 %v448
          %490 = vmatprep.subr.bf16.mxu0 0
          %491 = vmatpush1.bf16.msra.mxu0 %v447
          %492 = vmatprep.subr.bf16.mxu0 0
          %493 = vmatpush1.bf16.msra.mxu0 %v446
          %494 = vmatprep.subr.bf16.mxu0 0
          %495 = vmatpush2.bf16.msra.mxu0 %v461
          %496 = vmatprep.subr.bf16.mxu0 0
          %497 = vmatpush2.bf16.msra.mxu0 %v460
          %498 = vmatprep.subr.bf16.mxu0 0
          %499 = vmatpush2.bf16.msra.mxu0 %v459
          %500 = vmatprep.subr.bf16.mxu0 0
          %501 = vmatpush2.bf16.msra.mxu0 %v458
          %502 = vmatprep.subr.bf16.mxu0 0
          %503 = vmatpush2.bf16.msra.mxu0 %v457
          %504 = vmatprep.subr.bf16.mxu0 0
          %505 = vmatpush2.bf16.msra.mxu0 %v456
          %506 = vmatprep.subr.bf16.mxu0 0
          %507 = vmatpush2.bf16.msra.mxu0 %v455
          %508 = vmatprep.subr.bf16.mxu0 0
          %509 = vmatpush2.bf16.msra.mxu0 %v454
          %510 = vmatprep.mubr.bf16.mxu0 %v349
          %511 = vmatmul.mubr.bf16.gmra.mxu0 %v348
          %v512 = vpop.f32.mrf.mxu0
          %v513 = vadd.f32 0.0, %v512
          %v514 = vpop.f32.mrf.mxu0
          %v515 = vpop.f32.mrf.mxu0
          %v516 = vadd.f32 0.0, %v515
          %v517 = vpop.f32.mrf.mxu0
          %518 = vdwg.mxu0
          %v519 = vld [vmem:[#allocation3] sm:$0x1]
          %v520 = vadd.f32 %v513, %v516
          %v521 = vrot.slane %v520, 4
          %v522 = vadd.f32 %v520, %v521
          %v523 = vrot.slane %v522, 2
          %v524 = vadd.f32 %v522, %v523
          %v525 = vrot.slane %v524, 1
          %v526 = vadd.f32 %v524, %v525
          %v527 = vadd.f32 %v519, %v526
          %528 = vst [vmem:[#allocation3] sm:$0x1] %v527
          %v529 = vld [vmem:[#allocation4] sm:$0x1]
          %v530 = vmul.f32 %v513, %v513
          %v531 = vmul.f32 %v516, %v516
          %v532 = vadd.f32 %v530, %v531
          %v533 = vrot.slane %v532, 4
          %v534 = vadd.f32 %v532, %v533
          %v535 = vrot.slane %v534, 2
          %v536 = vadd.f32 %v534, %v535
          %v537 = vrot.slane %v536, 1
          %v538 = vadd.f32 %v536, %v537
          %v539 = vadd.f32 %v529, %v538
          %540 = vst [vmem:[#allocation4] sm:$0x1] %v539
          %v541 = vpack.c.bf16 %v516, %v513
          %v543 = vunpack.c.l.b16 %v541
          %v544 = vunpack.c.h.b16 %v541
          %v545 = vpack.c.b16 %v543, %v543
          %v546 = vpack.c.b16 %v544, %v544
          %s549 = smul.u32 %s29, 2
          %s550 = smul.addr %s549, 4
          %s551 = scalar_lea.vmem [#allocation2], %s550
          %552 = vst [vmem:[%s551] sm:$0xf] %v545
          %553 = vst [vmem:[%s551 + $0x4] sm:$0xf] %v546
        $region60: #{tpu_custom_call.1} parent=43 // pred_fallthru
          _
        %p554 = scmp.eq.s32.totalorder %s28, 1
        // Predicated region
        $region65: #{tpu_custom_call.1} parent=43 // pred_check
          %p555 = pneg %p554
        $region66: #{tpu_custom_call.1} parent=43 // pred_check_branch
          %557 = sbr.rel (%p555) target = $region68
        $region67: #{tpu_custom_call.1} parent=43 // pred_region
          %p558 = scmp.eq.s32.totalorder %s29, 0
          // Predicated region
          $region69: #{tpu_custom_call.1} parent=67 // pred_check
            %p559 = pneg %p558
          $region70: #{tpu_custom_call.1} parent=67 // pred_check_branch
            %561 = sbr.rel (%p559) target = $region72
          $region71: #{tpu_custom_call.1} parent=67 // pred_region
            %v562 = vld [vmem:[#allocation3] sm:$0x1]
            %v563 = vmul.f32 %v562, 0.015625
            %v564 = vld [vmem:[#allocation4] sm:$0x1]
            %v565 = vmul.f32 %v564, 0.015625
            %v566 = vmul.f32 %v563, %v563
            %v567 = vsub.f32 %v565, %v566
            %v568 = vmax.f32 %v567, 0.0
            %v569 = vld [vmem:[%s2] sm:$0x1]
            %v570 = vadd.f32 %v568, 1e-05
            %v571 = vrsqrt.pop %v570
            %v572 = vmul.f32 %v569, %v571
            %573 = vst [vmem:[#allocation5] sm:$0x1] %v572
            %v574 = vld [vmem:[%s3] sm:$0x1]
            %v575 = vmul.f32 %v563, %v572
            %v576 = vsub.f32 %v574, %v575
            %577 = vst [vmem:[#allocation6] sm:$0x1] %v576
          $region72: #{tpu_custom_call.1} parent=67 // pred_fallthru
            _
          %s578 = smul.u32 %s29, 2
          %s579 = smul.addr %s578, 4
          %s580 = scalar_lea.vmem [#allocation2], %s579
          %v581 = vld [vmem:[%s580] sm:$0xf]
          %v582 = vld [vmem:[%s580 + $0x4] sm:$0xf]
          %v583 = vunpack.c.l.bf16 %v581
          %v584 = vunpack.c.l.bf16 %v582
          %v585 = vld [vmem:[#allocation5] sm:$0x1]
          %v587 = vlaneseq
          %v588 = vshrl.u32 %v587, 7
          %v589 = vsub.s32 0, %v588
          %v590 = vrot.slane %v585, %v589
          %v592 = vmul.f32 %v583, %v590
          %v593 = vmul.f32 %v584, %v590
          %v594 = vld [vmem:[#allocation6] sm:$0x1]
          %v596 = vlaneseq
          %v597 = vshrl.u32 %v596, 7
          %v598 = vsub.s32 0, %v597
          %v599 = vrot.slane %v594, %v598
          %v601 = vadd.f32 %v592, %v599
          %v602 = vadd.f32 %v593, %v599
          %v603 = vmax.f32 %v601, 0.0
          %v604 = vmax.f32 %v602, 0.0
          %v605 = vpack.c.bf16 %v604, %v603
          %v606 = vld [vmem:[#allocation12] sm:$0xff]
          %v607 = vld [vmem:[#allocation12 + $0x8] sm:$0xff]
          %v608 = vld [vmem:[#allocation12 + $0x10] sm:$0xff]
          %v609 = vld [vmem:[#allocation12 + $0x18] sm:$0xff]
          %v610 = vld [vmem:[#allocation12 + $0x20] sm:$0xff]
          %v611 = vld [vmem:[#allocation12 + $0x28] sm:$0xff]
          %v612 = vld [vmem:[#allocation12 + $0x30] sm:$0xff]
          %v613 = vld [vmem:[#allocation12 + $0x38] sm:$0xff]
          %v614 = vld [vmem:[#allocation12 + $0x40] sm:$0xff]
          %v615 = vld [vmem:[#allocation12 + $0x48] sm:$0xff]
          %v616 = vld [vmem:[#allocation12 + $0x50] sm:$0xff]
          %v617 = vld [vmem:[#allocation12 + $0x58] sm:$0xff]
          %v618 = vld [vmem:[#allocation12 + $0x60] sm:$0xff]
          %v619 = vld [vmem:[#allocation12 + $0x68] sm:$0xff]
          %v620 = vld [vmem:[#allocation12 + $0x70] sm:$0xff]
          %v621 = vld [vmem:[#allocation12 + $0x78] sm:$0xff]
          %v622 = vld [vmem:[%s5] sm:$0x3]
          %v624 = vlaneseq
          %v625 = vshrl.u32 %v624, 7
          %v626 = vsub.s32 0, %v625
          %v627 = vrot.slane %v622, %v626
          %v628 = vlaneseq
          %v629 = vshrl.u32 %v628, 7
          %v630 = vsub.s32 1, %v629
          %v631 = vrot.slane %v622, %v630
          %v650 = vunpack.c.l.b16 %v606
          %v651 = vunpack.c.h.b16 %v606
          %v652 = vunpack.c.l.b16 %v607
          %v653 = vunpack.c.h.b16 %v607
          %v654 = vunpack.c.l.b16 %v608
          %v655 = vunpack.c.h.b16 %v608
          %v656 = vunpack.c.l.b16 %v609
          %v657 = vunpack.c.h.b16 %v609
          %v658 = vunpack.c.l.b16 %v610
          %v659 = vunpack.c.h.b16 %v610
          %v660 = vunpack.c.l.b16 %v611
          %v661 = vunpack.c.h.b16 %v611
          %v662 = vunpack.c.l.b16 %v612
          %v663 = vunpack.c.h.b16 %v612
          %v664 = vunpack.c.l.b16 %v613
          %v665 = vunpack.c.h.b16 %v613
          %v666 = vunpack.c.l.b16 %v614
          %v667 = vunpack.c.h.b16 %v614
          %v668 = vunpack.c.l.b16 %v615
          %v669 = vunpack.c.h.b16 %v615
          %v670 = vunpack.c.l.b16 %v616
          %v671 = vunpack.c.h.b16 %v616
          %v672 = vunpack.c.l.b16 %v617
          %v673 = vunpack.c.h.b16 %v617
          %v674 = vunpack.c.l.b16 %v618
          %v675 = vunpack.c.h.b16 %v618
          %v676 = vunpack.c.l.b16 %v619
          %v677 = vunpack.c.h.b16 %v619
          %v678 = vunpack.c.l.b16 %v620
          %v679 = vunpack.c.h.b16 %v620
          %v680 = vunpack.c.l.b16 %v621
          %v681 = vunpack.c.h.b16 %v621
          %v682 = vpack.c.b16 %v652, %v650
          %v683 = vpack.c.b16 %v653, %v651
          %v684 = vpack.c.b16 %v656, %v654
          %v685 = vpack.c.b16 %v657, %v655
          %v686 = vpack.c.b16 %v660, %v658
          %v687 = vpack.c.b16 %v661, %v659
          %v688 = vpack.c.b16 %v664, %v662
          %v689 = vpack.c.b16 %v665, %v663
          %v690 = vpack.c.b16 %v668, %v666
          %v691 = vpack.c.b16 %v669, %v667
          %v692 = vpack.c.b16 %v672, %v670
          %v693 = vpack.c.b16 %v673, %v671
          %v694 = vpack.c.b16 %v676, %v674
          %v695 = vpack.c.b16 %v677, %v675
          %v696 = vpack.c.b16 %v680, %v678
          %v697 = vpack.c.b16 %v681, %v679
          %714 = vmatprep.subr.bf16.mxu0 %v697
          %715 = vmatpush1.bf16.msra.mxu0 %v696
          %716 = vmatprep.subr.bf16.mxu0 %v695
          %717 = vmatpush1.bf16.msra.mxu0 %v694
          %718 = vmatprep.subr.bf16.mxu0 %v693
          %719 = vmatpush1.bf16.msra.mxu0 %v692
          %720 = vmatprep.subr.bf16.mxu0 %v691
          %721 = vmatpush1.bf16.msra.mxu0 %v690
          %722 = vmatprep.subr.bf16.mxu0 %v689
          %723 = vmatpush1.bf16.msra.mxu0 %v688
          %724 = vmatprep.subr.bf16.mxu0 %v687
          %725 = vmatpush1.bf16.msra.mxu0 %v686
          %726 = vmatprep.subr.bf16.mxu0 %v685
          %727 = vmatpush1.bf16.msra.mxu0 %v684
          %728 = vmatprep.subr.bf16.mxu0 %v683
          %729 = vmatpush1.bf16.msra.mxu0 %v682
          %730 = vmatprep.subr.bf16.mxu0 0
          %731 = vmatpush2.bf16.msra.mxu0 0
          %732 = vmatprep.subr.bf16.mxu0 0
          %733 = vmatpush2.bf16.msra.mxu0 0
          %734 = vmatprep.subr.bf16.mxu0 0
          %735 = vmatpush2.bf16.msra.mxu0 0
          %736 = vmatprep.subr.bf16.mxu0 0
          %737 = vmatpush2.bf16.msra.mxu0 0
          %738 = vmatprep.subr.bf16.mxu0 0
          %739 = vmatpush2.bf16.msra.mxu0 0
          %740 = vmatprep.subr.bf16.mxu0 0
          %741 = vmatpush2.bf16.msra.mxu0 0
          %742 = vmatprep.subr.bf16.mxu0 0
          %743 = vmatpush2.bf16.msra.mxu0 0
          %744 = vmatprep.subr.bf16.mxu0 0
          %745 = vmatpush2.bf16.msra.mxu0 0
          %746 = vmatprep.mubr.bf16.mxu0 0
          %747 = vmatmul.mubr.bf16.gmra.mxu0 %v605
          %v748 = vpop.f32.mrf.mxu0
          %v749 = vadd.f32 %v627, %v748
          %v750 = vpop.f32.mrf.mxu0
          %v751 = vadd.f32 %v631, %v750
          %v752 = vpop.f32.mrf.mxu0
          %v753 = vadd.f32 %v627, %v752
          %v754 = vpop.f32.mrf.mxu0
          %v755 = vadd.f32 %v631, %v754
          %756 = vdwg.mxu0
          %757 = vst [vmem:[%s325] sm:$0xff] %v749
          %758 = vst [vmem:[%s325 + $0x8] sm:$0xff] %v751
          %759 = vst [vmem:[%s325 + $0x10] sm:$0xff] %v753
          %760 = vst [vmem:[%s325 + $0x18] sm:$0xff] %v755
        $region68: #{tpu_custom_call.1} parent=43 // pred_fallthru
          _
        %s761 = sand.u32 %s185, 1
        %s762 = scalar_lea.sflag [#allocation9], %s761
        %s763 = sand.u32 %s185, 1
        %s764 = smul.addr %s763, 32
        %s765 = scalar_lea.vmem [#allocation13], %s764
        // Predicated region
        $region73: #{tpu_custom_call.1} parent=43 // pred_check
          %p766 = pneg %p195
        $region74: #{tpu_custom_call.1} parent=43 // pred_check_branch
          %768 = sbr.rel (%p766) target = $region76
        $region75: #{tpu_custom_call.1} parent=43 // pred_region
          %s769 = smul.u32 %s29, %s28
          %s770 = smul.u32 2, %s769
          %s772 = ssub.s32 512, 512
          %773 = vsyncadd %s762, %s772
          %s774 = smul.addr %s770, 2
          %s775 = smul.addr %s774, 128
          %s776 = scalar_lea.hbm %s6, %s775
          %s777 = sshll.u32 %s765, 4
          %s778 = int_to_ptr.vmem [resolvable:$true] %s777
          %783 = dma.vmem_to_hbm [thread:$0]  %s778, 512, %s776, %s762, 256, 256, 16
        $region76: #{tpu_custom_call.1} parent=43 // pred_fallthru
          _
      $region44: #{tpu_custom_call.1} parent=5 // pred_fallthru
        _
      %p784 = scmp.le.s32.totalorder 2, %s19
      // Predicated region
      $region77: #{tpu_custom_call.1} parent=5 // pred_check
        %p785 = pneg %p784
      $region78: #{tpu_custom_call.1} parent=5 // pred_check_branch
        %787 = sbr.rel (%p785) target = $region80
      $region79: #{tpu_custom_call.1} parent=5 // pred_region
        %s788 = ssub.s32 %s19, 2
        // Predicated region
        $region81: #{tpu_custom_call.1} parent=79 // pred_check
          %p789 = pneg %p201
        $region82: #{tpu_custom_call.1} parent=79 // pred_check_branch
          %791 = sbr.rel (%p789) target = $region84
        $region83: #{tpu_custom_call.1} parent=79 // pred_region
          %s792 = sand.u32 %s186, 1
          %s793 = scalar_lea.sflag [#allocation9], %s792
          %s794 = sand.u32 %s186, 1
          %s795 = smul.addr %s794, 32
          %s796 = scalar_lea.vmem [#allocation13], %s795
          %797 = dma.done %s793, 512
        $region84: #{tpu_custom_call.1} parent=79 // pred_fallthru
          _
      $region80: #{tpu_custom_call.1} parent=5 // pred_fallthru
        _
    $region6: #{tpu_custom_call.1} parent=1 // loop_footer
      %s23 = sadd.s32 1, %s19
    $region7: #{tpu_custom_call.1} parent=1 // loop_footer_branch
      %18 = sbr.rel target = $region3
    $region8: #{tpu_custom_call.1} parent=1 // loop_exit
      _
    %798 = vsyncpa [#allocation8], 1
    %s799 = scalar_lea.sflag [#allocation8], 1
    %800 = vsyncpa %s799, 1
    %801 = vsyncpa [#allocation11], 1
    %802 = vsyncpa [#allocation9], 1
    %s803 = scalar_lea.sflag [#allocation9], 1
    %804 = vsyncpa %s803, 1

// kernel: tpu_custom_call.1
$region0: #{tpu_custom_call.1}
  #allocation0 [shape = 'u32[]', space=smem, size = 0x4, offset = 0x4, fixed_abs, tag = 'smem constant byte address 0x4 - core index']
  #allocation1 [shape = 'u32[144,128]{1,0:T(1,128)}', space=vmem, size = 0x12000, scoped, tag = 'internal scratch']
  #allocation2 [shape = 'bf16[4,16,128]{2,1,0:T(8,128)(2,1)}', space=vmem, size = 0x4000, scoped, tag = 'scratch operand']
  #allocation3 [shape = 'f32[1,128]{1,0:T(1,128)}', space=vmem, size = 0x200, scoped, tag = 'scratch operand']
  #allocation4 [shape = 'f32[1,128]{1,0:T(1,128)}', space=vmem, size = 0x200, scoped, tag = 'scratch operand']
  #allocation5 [shape = 'f32[1,128]{1,0:T(1,128)}', space=vmem, size = 0x200, scoped, tag = 'scratch operand']
  #allocation6 [shape = 'f32[1,128]{1,0:T(1,128)}', space=vmem, size = 0x200, scoped, tag = 'scratch operand']
  %s0 = inlined_call_operand.hbm [shape: f32[64,256], index: 0, kind: input, shape index: {}]
  %s1 = inlined_call_operand.hbm [shape: bf16[256,128], index: 1, kind: input, shape index: {}]
  %s2 = inlined_call_operand.vmem [shape: f32[1,128], index: 2, kind: input, shape index: {}]
  %s3 = inlined_call_operand.vmem [shape: f32[1,128], index: 3, kind: input, shape index: {}]
  %s4 = inlined_call_operand.hbm [shape: bf16[128,256], index: 4, kind: input, shape index: {}]
  %s5 = inlined_call_operand.vmem [shape: f32[1,256], index: 5, kind: input, shape index: {}]
  %s6 = inlined_call_operand.hbm [shape: f32[64,256], index: 6, kind: output, shape index: {}]
  %s7 = sld [smem:[#allocation0]]
  $region85: #{tpu_custom_call.1} parent=0
    _
  %s9 = ssub.s32 1, %s7
  %s10 = scalar_select 0, %s9, %s7
  $region1: #{tpu_custom_call.1} parent=0
    #allocation7 [shape = 'u8[32768]{0}', space=vmem, size = 0x8000, scoped, tag = 'input window, operand 0']
    #allocation8 [shape = 's32[2]{0}', space=sflag, size = 0x8, scoped, tag = 'scoped memory for tpu_custom_call.1']
    #allocation9 [shape = 's32[2]{0}', space=sflag, size = 0x8, scoped, tag = 'scoped memory for tpu_custom_call.1']
    #allocation10 [shape = 'u8[65536]{0}', space=vmem, size = 0x10000, scoped, tag = 'input window, operand 1, single buffered']
    #allocation11 [shape = 's32[1]{0}', space=sflag, size = 0x4, scoped, tag = 'scoped memory for tpu_custom_call.1']
    #allocation12 [shape = 'u8[65536]{0}', space=vmem, size = 0x10000, scoped, tag = 'input window, operand 4, single buffered']
    #allocation13 [shape = 'u8[32768]{0}', space=vmem, size = 0x8000, scoped, tag = 'output window, operand 0']
    %11 = vsyncpa [#allocation8], 0
    %s12 = scalar_lea.sflag [#allocation8], 1
    %13 = vsyncpa %s12, 0
    %14 = vsyncpa [#allocation11], 0
    %15 = vsyncpa [#allocation9], 0
    %s16 = scalar_lea.sflag [#allocation9], 1
    %17 = vsyncpa %s16, 0
    loop: start=0, step=1, limit=10
    $region2: #{tpu_custom_call.1} parent=1 // loop_pre_header
      _
    $region3: #{tpu_custom_call.1} parent=1 // loop_header
      %s19 = sphi 0, %s23
      %p20 = scmp.ge.s32.totalorder %s19, 10
      %s26 = sphi 0, %s38
      %s27 = sphi 0, %s34
      %s28 = sphi 0, %s26
      %s29 = sphi 0, %s27
      %s30 = sphi 0, %s28
      %s31 = sphi 0, %s29
      %s49 = sphi 0, %s51
      %s52 = sphi 0, %s49
      %s53 = sphi 0, %s52
      %s69 = sphi 0, %s53
      %s73 = sphi 0, %s73
      %s75 = sphi 0, %s73
      %s76 = sphi 0, %s75
      %s90 = sphi 0, %s76
      %s94 = sphi 0, %s94
      %s96 = sphi 0, %s94
      %s97 = sphi 0, %s96
      %s111 = sphi 0, %s97
      %s115 = sphi 0, %s115
      %s117 = sphi 0, %s115
      %s118 = sphi 0, %s117
      %s132 = sphi 0, %s118
      %s136 = sphi 0, %s136
      %s138 = sphi 0, %s136
      %s139 = sphi 0, %s138
      %s153 = sphi 0, %s139
      %s157 = sphi 0, %s157
      %s159 = sphi 0, %s157
      %s160 = sphi 0, %s159
      %s174 = sphi 0, %s160
      %s182 = sphi 0, %s184
      %s185 = sphi 0, %s182
      %s186 = sphi 0, %s185
      %s202 = sphi 0, %s186
    $region4: #{tpu_custom_call.1} parent=1 // loop_header_branch
      %22 = sbr.rel (%p20) target = $region8
    $region5: #{tpu_custom_call.1} parent=1 // loop_body
      %s24 = ssub.s32 %s19, 1
      %s25 = ssub.s32 %s19, 2
      %s32 = sadd.s32 1, %s27
      %p33 = scmp.ge.s32.totalorder %s32, 4
      %s34 = scalar_select %p33, 0, %s32
      %s35 = sadd.s32 1, %s26
      %s36 = scalar_select %p33, %s35, %s26
      %p37 = scmp.ge.s32.totalorder %s36, 2
      %s38 = scalar_select %p37, 0, %s36
      %s39 = ssub.s32 1, %s26
      %s40 = smul.u32 %s27, %s39
      %s41 = smul.u32 %s26, 3
      %s42 = sadd.s32 %s40, %s41
      %s43 = ssub.s32 1, %s38
      %s44 = smul.u32 %s34, %s43
      %s45 = smul.u32 %s38, 3
      %s46 = sadd.s32 %s44, %s45
      %s47 = ssub.s32 %s42, %s46
      %p48 = scmp.eq.s32.totalorder %s47, 0
      %s50 = sadd.s32 %s49, 1
      %s51 = scalar_select %p48, %s49, %s50
      %p54 = pneg %p48
      %p55 = scmp.eq.s32.totalorder %s19, 7
      %p56 = por %p54, %p55
      %p57 = scmp.ne.s32.totalorder %s49, %s52
      %p58 = scmp.eq.s32.totalorder %s19, 0
      %p59 = por %p57, %p58
      %p60 = scmp.ne.s32.totalorder %s49, %s52
      %p61 = scmp.eq.s32.totalorder %s24, 7
      %p62 = por %p60, %p61
      %p63 = scmp.ne.s32.totalorder %s52, %s53
      %p64 = scmp.eq.s32.totalorder %s24, 0
      %p65 = por %p63, %p64
      %p66 = scmp.ne.s32.totalorder %s52, %s53
      %p67 = scmp.eq.s32.totalorder %s25, 7
      %p68 = por %p66, %p67
      %p70 = scmp.ne.s32.totalorder %s53, %s69
      %p71 = scmp.eq.s32.totalorder %s25, 0
      %p72 = por %p70, %p71
      %s74 = sadd.s32 %s73, 1
      %p77 = scmp.eq.s32.totalorder %s19, 7
      %p78 = scmp.ne.s32.totalorder %s73, %s75
      %p79 = scmp.eq.s32.totalorder %s19, 0
      %p80 = por %p78, %p79
      %p81 = scmp.ne.s32.totalorder %s73, %s75
      %p82 = scmp.eq.s32.totalorder %s24, 7
      %p83 = por %p81, %p82
      %p84 = scmp.ne.s32.totalorder %s75, %s76
      %p85 = scmp.eq.s32.totalorder %s24, 0
      %p86 = por %p84, %p85
      %p87 = scmp.ne.s32.totalorder %s75, %s76
      %p88 = scmp.eq.s32.totalorder %s25, 7
      %p89 = por %p87, %p88
      %p91 = scmp.ne.s32.totalorder %s76, %s90
      %p92 = scmp.eq.s32.totalorder %s25, 0
      %p93 = por %p91, %p92
      %s95 = sadd.s32 %s94, 1
      %p98 = scmp.eq.s32.totalorder %s19, 7
      %p99 = scmp.ne.s32.totalorder %s94, %s96
      %p100 = scmp.eq.s32.totalorder %s19, 0
      %p101 = por %p99, %p100
      %p102 = scmp.ne.s32.totalorder %s94, %s96
      %p103 = scmp.eq.s32.totalorder %s24, 7
      %p104 = por %p102, %p103
      %p105 = scmp.ne.s32.totalorder %s96, %s97
      %p106 = scmp.eq.s32.totalorder %s24, 0
      %p107 = por %p105, %p106
      %p108 = scmp.ne.s32.totalorder %s96, %s97
      %p109 = scmp.eq.s32.totalorder %s25, 7
      %p110 = por %p108, %p109
      %p112 = scmp.ne.s32.totalorder %s97, %s111
      %p113 = scmp.eq.s32.totalorder %s25, 0
      %p114 = por %p112, %p113
      %s116 = sadd.s32 %s115, 1
      %p119 = scmp.eq.s32.totalorder %s19, 7
      %p120 = scmp.ne.s32.totalorder %s115, %s117
      %p121 = scmp.eq.s32.totalorder %s19, 0
      %p122 = por %p120, %p121
      %p123 = scmp.ne.s32.totalorder %s115, %s117
      %p124 = scmp.eq.s32.totalorder %s24, 7
      %p125 = por %p123, %p124
      %p126 = scmp.ne.s32.totalorder %s117, %s118
      %p127 = scmp.eq.s32.totalorder %s24, 0
      %p128 = por %p126, %p127
      %p129 = scmp.ne.s32.totalorder %s117, %s118
      %p130 = scmp.eq.s32.totalorder %s25, 7
      %p131 = por %p129, %p130
      %p133 = scmp.ne.s32.totalorder %s118, %s132
      %p134 = scmp.eq.s32.totalorder %s25, 0
      %p135 = por %p133, %p134
      %s137 = sadd.s32 %s136, 1
      %p140 = scmp.eq.s32.totalorder %s19, 7
      %p141 = scmp.ne.s32.totalorder %s136, %s138
      %p142 = scmp.eq.s32.totalorder %s19, 0
      %p143 = por %p141, %p142
      %p144 = scmp.ne.s32.totalorder %s136, %s138
      %p145 = scmp.eq.s32.totalorder %s24, 7
      %p146 = por %p144, %p145
      %p147 = scmp.ne.s32.totalorder %s138, %s139
      %p148 = scmp.eq.s32.totalorder %s24, 0
      %p149 = por %p147, %p148
      %p150 = scmp.ne.s32.totalorder %s138, %s139
      %p151 = scmp.eq.s32.totalorder %s25, 7
      %p152 = por %p150, %p151
      %p154 = scmp.ne.s32.totalorder %s139, %s153
      %p155 = scmp.eq.s32.totalorder %s25, 0
      %p156 = por %p154, %p155
      %s158 = sadd.s32 %s157, 1
      %p161 = scmp.eq.s32.totalorder %s19, 7
      %p162 = scmp.ne.s32.totalorder %s157, %s159
      %p163 = scmp.eq.s32.totalorder %s19, 0
      %p164 = por %p162, %p163
      %p165 = scmp.ne.s32.totalorder %s157, %s159
      %p166 = scmp.eq.s32.totalorder %s24, 7
      %p167 = por %p165, %p166
      %p168 = scmp.ne.s32.totalorder %s159, %s160
      %p169 = scmp.eq.s32.totalorder %s24, 0
      %p170 = por %p168, %p169
      %p171 = scmp.ne.s32.totalorder %s159, %s160
      %p172 = scmp.eq.s32.totalorder %s25, 7
      %p173 = por %p171, %p172
      %p175 = scmp.ne.s32.totalorder %s160, %s174
      %p176 = scmp.eq.s32.totalorder %s25, 0
      %p177 = por %p175, %p176
      %s178 = smul.u32 %s27, %s26
      %s179 = smul.u32 %s34, %s38
      %s180 = ssub.s32 %s178, %s179
      %p181 = scmp.eq.s32.totalorder %s180, 0
      %s183 = sadd.s32 %s182, 1
      %s184 = scalar_select %p181, %s182, %s183
      %p187 = pneg %p181
      %p188 = scmp.eq.s32.totalorder %s19, 7
      %p189 = por %p187, %p188
      %p190 = scmp.ne.s32.totalorder %s182, %s185
      %p191 = scmp.eq.s32.totalorder %s19, 0
      %p192 = por %p190, %p191
      %p193 = scmp.ne.s32.totalorder %s182, %s185
      %p194 = scmp.eq.s32.totalorder %s24, 7
      %p195 = por %p193, %p194
      %p196 = scmp.ne.s32.totalorder %s185, %s186
      %p197 = scmp.eq.s32.totalorder %s24, 0
      %p198 = por %p196, %p197
      %p199 = scmp.ne.s32.totalorder %s185, %s186
      %p200 = scmp.eq.s32.totalorder %s25, 7
      %p201 = por %p199, %p200
      %p203 = scmp.ne.s32.totalorder %s186, %s202
      %p204 = scmp.eq.s32.totalorder %s25, 0
      %p205 = por %p203, %p204
      %p206 = scmp.le.s32.totalorder 1, %s19
      %p207 = scmp.lt.s32.totalorder %s19, 9
      %p208 = pnand %p206, %p207
      %p209 = pneg %p208
      // Predicated region
      $region9: #{tpu_custom_call.1} parent=5 // pred_check
        _
      $region10: #{tpu_custom_call.1} parent=5 // pred_check_branch
        %211 = sbr.rel (%p208) target = $region12
      $region11: #{tpu_custom_call.1} parent=5 // pred_region
        %s212 = ssub.s32 %s19, 1
        // Predicated region
        $region13: #{tpu_custom_call.1} parent=11 // pred_check
          %p213 = pneg %p86
        $region14: #{tpu_custom_call.1} parent=11 // pred_check_branch
          %215 = sbr.rel (%p213) target = $region16
        $region15: #{tpu_custom_call.1} parent=11 // pred_region
          %s217 = ssub.s32 2048, 2048
          %218 = vsyncadd [#allocation11], %s217
          %s219 = sshll.u32 [#allocation10], 4
          %s220 = int_to_ptr.vmem [resolvable:$true] %s219
          %225 = dma.hbm_to_vmem [thread:$0]  %s1, 2048, %s220, [#allocation11], 64, 64, 4
        $region16: #{tpu_custom_call.1} parent=11 // pred_fallthru
          _
        // Predicated region
        $region17: #{tpu_custom_call.1} parent=11 // pred_check
          %p226 = pneg %p107
        $region18: #{tpu_custom_call.1} parent=11 // pred_check_branch
          %228 = sbr.rel (%p226) target = $region20
        $region19: #{tpu_custom_call.1} parent=11 // pred_region
          _
        $region20: #{tpu_custom_call.1} parent=11 // pred_fallthru
          _
        // Predicated region
        $region21: #{tpu_custom_call.1} parent=11 // pred_check
          %p229 = pneg %p128
        $region22: #{tpu_custom_call.1} parent=11 // pred_check_branch
          %231 = sbr.rel (%p229) target = $region24
        $region23: #{tpu_custom_call.1} parent=11 // pred_region
          _
        $region24: #{tpu_custom_call.1} parent=11 // pred_fallthru
          _
        // Predicated region
        $region25: #{tpu_custom_call.1} parent=11 // pred_check
          %p232 = pneg %p149
        $region26: #{tpu_custom_call.1} parent=11 // pred_check_branch
          %234 = sbr.rel (%p232) target = $region28
        $region27: #{tpu_custom_call.1} parent=11 // pred_region
          %s236 = ssub.s32 2048, 2048
          %237 = vsyncadd [#allocation11], %s236
          %s238 = sshll.u32 [#allocation12], 4
          %s239 = int_to_ptr.vmem [resolvable:$true] %s238
          %244 = dma.hbm_to_vmem [thread:$0]  %s4, 2048, %s239, [#allocation11], 128, 128, 8
        $region28: #{tpu_custom_call.1} parent=11 // pred_fallthru
          _
        // Predicated region
        $region29: #{tpu_custom_call.1} parent=11 // pred_check
          %p245 = pneg %p170
        $region30: #{tpu_custom_call.1} parent=11 // pred_check_branch
          %247 = sbr.rel (%p245) target = $region32
        $region31: #{tpu_custom_call.1} parent=11 // pred_region
          _
        $region32: #{tpu_custom_call.1} parent=11 // pred_fallthru
          _
      $region12: #{tpu_custom_call.1} parent=5 // pred_fallthru
        _
      %p248 = scmp.lt.s32.totalorder %s19, 8
      // Predicated region
      $region33: #{tpu_custom_call.1} parent=5 // pred_check
        %p249 = pneg %p248
      $region34: #{tpu_custom_call.1} parent=5 // pred_check_branch
        %251 = sbr.rel (%p249) target = $region36
      $region35: #{tpu_custom_call.1} parent=5 // pred_region
        // Predicated region
        $region37: #{tpu_custom_call.1} parent=35 // pred_check
          %p252 = pneg %p59
        $region38: #{tpu_custom_call.1} parent=35 // pred_check_branch
          %254 = sbr.rel (%p252) target = $region40
        $region39: #{tpu_custom_call.1} parent=35 // pred_region
          %s255 = sand.u32 %s49, 1
          %s256 = scalar_lea.sflag [#allocation8], %s255
          %s257 = sand.u32 %s49, 1
          %s258 = smul.addr %s257, 32
          %s259 = scalar_lea.vmem [#allocation7], %s258
          %s260 = ssub.s32 1, %s26
          %s261 = smul.u32 %s27, %s260
          %s262 = smul.u32 %s26, 3
          %s263 = sadd.s32 %s261, %s262
          %s264 = smul.u32 2, %s263
          %s266 = ssub.s32 512, 512
          %267 = vsyncadd %s256, %s266
          %s268 = smul.addr %s264, 2
          %s269 = smul.addr %s268, 128
          %s270 = scalar_lea.hbm %s0, %s269
          %s271 = sshll.u32 %s259, 4
          %s272 = int_to_ptr.vmem [resolvable:$true] %s271
          %277 = dma.hbm_to_vmem [thread:$0]  %s270, 512, %s272, %s256, 256, 256, 16
        $region40: #{tpu_custom_call.1} parent=35 // pred_fallthru
          _
      $region36: #{tpu_custom_call.1} parent=5 // pred_fallthru
        _
      %p278 = scmp.le.s32.totalorder 1, %s19
      %p279 = scmp.lt.s32.totalorder %s19, 9
      %p280 = pnand %p278, %p279
      %p281 = pneg %p280
      // Predicated region
      $region41: #{tpu_custom_call.1} parent=5 // pred_check
        _
      $region42: #{tpu_custom_call.1} parent=5 // pred_check_branch
        %283 = sbr.rel (%p280) target = $region44
      $region43: #{tpu_custom_call.1} parent=5 // pred_region
        %s284 = ssub.s32 %s19, 1
        %s285 = sand.u32 %s52, 1
        %s286 = scalar_lea.sflag [#allocation8], %s285
        %s287 = sand.u32 %s52, 1
        %s288 = smul.addr %s287, 32
        %s289 = scalar_lea.vmem [#allocation7], %s288
        // Predicated region
        $region45: #{tpu_custom_call.1} parent=43 // pred_check
          %p290 = pneg %p65
        $region46: #{tpu_custom_call.1} parent=43 // pred_check_branch
          %292 = sbr.rel (%p290) target = $region48
        $region47: #{tpu_custom_call.1} parent=43 // pred_region
          %293 = dma.done %s286, 512
        $region48: #{tpu_custom_call.1} parent=43 // pred_fallthru
          _
        // Predicated region
        $region49: #{tpu_custom_call.1} parent=43 // pred_check
          %p294 = pneg %p86
        $region50: #{tpu_custom_call.1} parent=43 // pred_check_branch
          %296 = sbr.rel (%p294) target = $region52
        $region51: #{tpu_custom_call.1} parent=43 // pred_region
          %297 = dma.done [#allocation11], 2048
        $region52: #{tpu_custom_call.1} parent=43 // pred_fallthru
          _
        // Predicated region
        $region53: #{tpu_custom_call.1} parent=43 // pred_check
          %p298 = pneg %p149
        $region54: #{tpu_custom_call.1} parent=43 // pred_check_branch
          %300 = sbr.rel (%p298) target = $region56
        $region55: #{tpu_custom_call.1} parent=43 // pred_region
          %301 = dma.done [#allocation11], 2048
        $region56: #{tpu_custom_call.1} parent=43 // pred_fallthru
          _
        %s302 = sand.u32 %s52, 1
        %s303 = scalar_lea.sflag [#allocation8], %s302
        %s304 = sand.u32 %s52, 1
        %s305 = smul.addr %s304, 32
        %s306 = scalar_lea.vmem [#allocation7], %s305
        %p307 = pneg %p65
        %p308 = pneg %p62
        %p309 = pneg %p86
        %p310 = pneg %p83
        %p311 = pneg %p107
        %p312 = pneg %p104
        %p313 = pneg %p128
        %p314 = pneg %p125
        %p315 = pneg %p149
        %p316 = pneg %p146
        %p317 = pneg %p170
        %p318 = pneg %p167
        %p319 = pneg %p198
        %p320 = pneg %p195
        %s321 = sand.u32 %s185, 1
        %s322 = scalar_lea.sflag [#allocation9], %s321
        %s323 = sand.u32 %s185, 1
        %s324 = smul.addr %s323, 32
        %s325 = scalar_lea.vmem [#allocation13], %s324
        %s326 = ssub.s32 1, %s28
        %s327 = smul.u32 %s29, %s326
        %s328 = smul.u32 %s28, 3
        %s329 = sadd.s32 %s327, %s328
        %s330 = smul.u32 2, %s329
        %s331 = smul.u32 %s29, %s28
        %s332 = smul.u32 2, %s331
        %p334 = scmp.eq.s32.totalorder %s28, 0
        // Predicated region
        $region57: #{tpu_custom_call.1} parent=43 // pred_check
          %p335 = pneg %p334
        $region58: #{tpu_custom_call.1} parent=43 // pred_check_branch
          %337 = sbr.rel (%p335) target = $region60
        $region59: #{tpu_custom_call.1} parent=43 // pred_region
          %p338 = scmp.eq.s32.totalorder %s29, 0
          // Predicated region
          $region61: #{tpu_custom_call.1} parent=59 // pred_check
            %p339 = pneg %p338
          $region62: #{tpu_custom_call.1} parent=59 // pred_check_branch
            %341 = sbr.rel (%p339) target = $region64
          $region63: #{tpu_custom_call.1} parent=59 // pred_region
            %342 = vst [vmem:[#allocation3] sm:$0x1] 0.0
            %343 = vst [vmem:[#allocation4] sm:$0x1] 0.0
          $region64: #{tpu_custom_call.1} parent=59 // pred_fallthru
            _
          %v344 = vld [vmem:[%s289] sm:$0xff]
          %v345 = vld [vmem:[%s289 + $0x8] sm:$0xff]
          %v346 = vld [vmem:[%s289 + $0x10] sm:$0xff]
          %v347 = vld [vmem:[%s289 + $0x18] sm:$0xff]
          %v348 = vpack.c.bf16 %v346, %v344
          %v349 = vpack.c.bf16 %v347, %v345
          %v350 = vld [vmem:[#allocation10] sm:$0xf]
          %v351 = vld [vmem:[#allocation10 + $0x4] sm:$0xf]
          %v352 = vld [vmem:[#allocation10 + $0x8] sm:$0xf]
          %v353 = vld [vmem:[#allocation10 + $0xc] sm:$0xf]
          %v354 = vld [vmem:[#allocation10 + $0x10] sm:$0xf]
          %v355 = vld [vmem:[#allocation10 + $0x14] sm:$0xf]
          %v356 = vld [vmem:[#allocation10 + $0x18] sm:$0xf]
          %v357 = vld [vmem:[#allocation10 + $0x1c] sm:$0xf]
          %v358 = vld [vmem:[#allocation10 + $0x20] sm:$0xf]
          %v359 = vld [vmem:[#allocation10 + $0x24] sm:$0xf]
          %v360 = vld [vmem:[#allocation10 + $0x28] sm:$0xf]
          %v361 = vld [vmem:[#allocation10 + $0x2c] sm:$0xf]
          %v362 = vld [vmem:[#allocation10 + $0x30] sm:$0xf]
          %v363 = vld [vmem:[#allocation10 + $0x34] sm:$0xf]
          %v364 = vld [vmem:[#allocation10 + $0x38] sm:$0xf]
          %v365 = vld [vmem:[#allocation10 + $0x3c] sm:$0xf]
          %v366 = vld [vmem:[#allocation10 + $0x40] sm:$0xf]
          %v367 = vld [vmem:[#allocation10 + $0x44] sm:$0xf]
          %v368 = vld [vmem:[#allocation10 + $0x48] sm:$0xf]
          %v369 = vld [vmem:[#allocation10 + $0x4c] sm:$0xf]
          %v370 = vld [vmem:[#allocation10 + $0x50] sm:$0xf]
          %v371 = vld [vmem:[#allocation10 + $0x54] sm:$0xf]
          %v372 = vld [vmem:[#allocation10 + $0x58] sm:$0xf]
          %v373 = vld [vmem:[#allocation10 + $0x5c] sm:$0xf]
          %v374 = vld [vmem:[#allocation10 + $0x60] sm:$0xf]
          %v375 = vld [vmem:[#allocation10 + $0x64] sm:$0xf]
          %v376 = vld [vmem:[#allocation10 + $0x68] sm:$0xf]
          %v377 = vld [vmem:[#allocation10 + $0x6c] sm:$0xf]
          %v378 = vld [vmem:[#allocation10 + $0x70] sm:$0xf]
          %v379 = vld [vmem:[#allocation10 + $0x74] sm:$0xf]
          %v380 = vld [vmem:[#allocation10 + $0x78] sm:$0xf]
          %v381 = vld [vmem:[#allocation10 + $0x7c] sm:$0xf]
          %v414 = vunpack.c.l.b16 %v350
          %v415 = vunpack.c.l.b16 %v351
          %v416 = vunpack.c.l.b16 %v352
          %v417 = vunpack.c.l.b16 %v353
          %v418 = vunpack.c.l.b16 %v354
          %v419 = vunpack.c.l.b16 %v355
          %v420 = vunpack.c.l.b16 %v356
          %v421 = vunpack.c.l.b16 %v357
          %v422 = vunpack.c.l.b16 %v358
          %v423 = vunpack.c.l.b16 %v359
          %v424 = vunpack.c.l.b16 %v360
          %v425 = vunpack.c.l.b16 %v361
          %v426 = vunpack.c.l.b16 %v362
          %v427 = vunpack.c.l.b16 %v363
          %v428 = vunpack.c.l.b16 %v364
          %v429 = vunpack.c.l.b16 %v365
          %v430 = vunpack.c.l.b16 %v366
          %v431 = vunpack.c.l.b16 %v367
          %v432 = vunpack.c.l.b16 %v368
          %v433 = vunpack.c.l.b16 %v369
          %v434 = vunpack.c.l.b16 %v370
          %v435 = vunpack.c.l.b16 %v371
          %v436 = vunpack.c.l.b16 %v372
          %v437 = vunpack.c.l.b16 %v373
          %v438 = vunpack.c.l.b16 %v374
          %v439 = vunpack.c.l.b16 %v375
          %v440 = vunpack.c.l.b16 %v376
          %v441 = vunpack.c.l.b16 %v377
          %v442 = vunpack.c.l.b16 %v378
          %v443 = vunpack.c.l.b16 %v379
          %v444 = vunpack.c.l.b16 %v380
          %v445 = vunpack.c.l.b16 %v381
          %v446 = vpack.c.b16 %v415, %v414
          %v447 = vpack.c.b16 %v417, %v416
          %v448 = vpack.c.b16 %v419, %v418
          %v449 = vpack.c.b16 %v421, %v420
          %v450 = vpack.c.b16 %v423, %v422
          %v451 = vpack.c.b16 %v425, %v424
          %v452 = vpack.c.b16 %v427, %v426
          %v453 = vpack.c.b16 %v429, %v428
          %v454 = vpack.c.b16 %v431, %v430
          %v455 = vpack.c.b16 %v433, %v432
          %v456 = vpack.c.b16 %v435, %v434
          %v457 = vpack.c.b16 %v437, %v436
          %v458 = vpack.c.b16 %v439, %v438
          %v459 = vpack.c.b16 %v441, %v440
          %v460 = vpack.c.b16 %v443, %v442
          %v461 = vpack.c.b16 %v445, %v444
          %478 = vmatprep.subr.bf16.mxu0 0
          %479 = vmatpush1.bf16.msra.mxu0 %v453
          %480 = vmatprep.subr.bf16.mxu0 0
          %481 = vmatpush1.bf16.msra.mxu0 %v452
          %482 = vmatprep.subr.bf16.mxu0 0
          %483 = vmatpush1.bf16.msra.mxu0 %v451
          %484 = vmatprep.subr.bf16.mxu0 0
          %485 = vmatpush1.bf16.msra.mxu0 %v450
          %486 = vmatprep.subr.bf16.mxu0 0
          %487 = vmatpush1.bf16.msra.mxu0 %v449
          %488 = vmatprep.subr.bf16.mxu0 0
          %489 = vmatpush1.bf16.msra.mxu0 %v448
          %490 = vmatprep.subr.bf16.mxu0 0
          %491 = vmatpush1.bf16.msra.mxu0 %v447
          %492 = vmatprep.subr.bf16.mxu0 0
          %493 = vmatpush1.bf16.msra.mxu0 %v446
          %494 = vmatprep.subr.bf16.mxu0 0
          %495 = vmatpush2.bf16.msra.mxu0 %v461
          %496 = vmatprep.subr.bf16.mxu0 0
          %497 = vmatpush2.bf16.msra.mxu0 %v460
          %498 = vmatprep.subr.bf16.mxu0 0
          %499 = vmatpush2.bf16.msra.mxu0 %v459
          %500 = vmatprep.subr.bf16.mxu0 0
          %501 = vmatpush2.bf16.msra.mxu0 %v458
          %502 = vmatprep.subr.bf16.mxu0 0
          %503 = vmatpush2.bf16.msra.mxu0 %v457
          %504 = vmatprep.subr.bf16.mxu0 0
          %505 = vmatpush2.bf16.msra.mxu0 %v456
          %506 = vmatprep.subr.bf16.mxu0 0
          %507 = vmatpush2.bf16.msra.mxu0 %v455
          %508 = vmatprep.subr.bf16.mxu0 0
          %509 = vmatpush2.bf16.msra.mxu0 %v454
          %510 = vmatprep.mubr.bf16.mxu0 %v349
          %511 = vmatmul.mubr.bf16.gmra.mxu0 %v348
          %v512 = vpop.f32.mrf.mxu0
          %v513 = vadd.f32 0.0, %v512
          %v514 = vpop.f32.mrf.mxu0
          %v515 = vpop.f32.mrf.mxu0
          %v516 = vadd.f32 0.0, %v515
          %v517 = vpop.f32.mrf.mxu0
          %518 = vdwg.mxu0
          %v519 = vld [vmem:[#allocation3] sm:$0x1]
          %v520 = vadd.f32 %v513, %v516
          %v521 = vrot.slane %v520, 4
          %v522 = vadd.f32 %v520, %v521
          %v523 = vrot.slane %v522, 2
          %v524 = vadd.f32 %v522, %v523
          %v525 = vrot.slane %v524, 1
          %v526 = vadd.f32 %v524, %v525
          %v527 = vadd.f32 %v519, %v526
          %528 = vst [vmem:[#allocation3] sm:$0x1] %v527
          %v529 = vld [vmem:[#allocation4] sm:$0x1]
          %v530 = vmul.f32 %v513, %v513
          %v531 = vmul.f32 %v516, %v516
          %v532 = vadd.f32 %v530, %v531
          %v533 = vrot.slane %v532, 4
          %v534 = vadd.f32 %v532, %v533
          %v535 = vrot.slane %v534, 2
          %v536 = vadd.f32 %v534, %v535
          %v537 = vrot.slane %v536, 1
          %v538 = vadd.f32 %v536, %v537
          %v539 = vadd.f32 %v529, %v538
          %540 = vst [vmem:[#allocation4] sm:$0x1] %v539
          %v541 = vpack.c.bf16 %v516, %v513
          %v543 = vunpack.c.l.b16 %v541
          %v544 = vunpack.c.h.b16 %v541
          %v545 = vpack.c.b16 %v543, %v543
          %v546 = vpack.c.b16 %v544, %v544
          %s549 = smul.u32 %s29, 2
          %s550 = smul.addr %s549, 4
          %s551 = scalar_lea.vmem [#allocation2], %s550
          %552 = vst [vmem:[%s551] sm:$0xf] %v545
          %553 = vst [vmem:[%s551 + $0x4] sm:$0xf] %v546
        $region60: #{tpu_custom_call.1} parent=43 // pred_fallthru
          _
        %p554 = scmp.eq.s32.totalorder %s28, 1
        // Predicated region
        $region65: #{tpu_custom_call.1} parent=43 // pred_check
          %p555 = pneg %p554
        $region66: #{tpu_custom_call.1} parent=43 // pred_check_branch
          %557 = sbr.rel (%p555) target = $region68
        $region67: #{tpu_custom_call.1} parent=43 // pred_region
          %p558 = scmp.eq.s32.totalorder %s29, 0
          // Predicated region
          $region69: #{tpu_custom_call.1} parent=67 // pred_check
            %p559 = pneg %p558
          $region70: #{tpu_custom_call.1} parent=67 // pred_check_branch
            %561 = sbr.rel (%p559) target = $region72
          $region71: #{tpu_custom_call.1} parent=67 // pred_region
            %v562 = vld [vmem:[#allocation3] sm:$0x1]
            %v563 = vmul.f32 %v562, 0.015625
            %v564 = vld [vmem:[#allocation4] sm:$0x1]
            %v565 = vmul.f32 %v564, 0.015625
            %v566 = vmul.f32 %v563, %v563
            %v567 = vsub.f32 %v565, %v566
            %v568 = vmax.f32 %v567, 0.0
            %v569 = vld [vmem:[%s2] sm:$0x1]
            %v570 = vadd.f32 %v568, 1e-05
            %v571 = vrsqrt.pop %v570
            %v572 = vmul.f32 %v569, %v571
            %573 = vst [vmem:[#allocation5] sm:$0x1] %v572
            %v574 = vld [vmem:[%s3] sm:$0x1]
            %v575 = vmul.f32 %v563, %v572
            %v576 = vsub.f32 %v574, %v575
            %577 = vst [vmem:[#allocation6] sm:$0x1] %v576
          $region72: #{tpu_custom_call.1} parent=67 // pred_fallthru
            _
          %s578 = smul.u32 %s29, 2
          %s579 = smul.addr %s578, 4
          %s580 = scalar_lea.vmem [#allocation2], %s579
          %v581 = vld [vmem:[%s580] sm:$0xf]
          %v582 = vld [vmem:[%s580 + $0x4] sm:$0xf]
          %v583 = vunpack.c.l.bf16 %v581
          %v584 = vunpack.c.l.bf16 %v582
          %v585 = vld [vmem:[#allocation5] sm:$0x1]
          %v587 = vlaneseq
          %v588 = vshrl.u32 %v587, 7
          %v589 = vsub.s32 0, %v588
          %v590 = vrot.slane %v585, %v589
          %v592 = vmul.f32 %v583, %v590
          %v593 = vmul.f32 %v584, %v590
          %v594 = vld [vmem:[#allocation6] sm:$0x1]
          %v596 = vlaneseq
          %v597 = vshrl.u32 %v596, 7
          %v598 = vsub.s32 0, %v597
          %v599 = vrot.slane %v594, %v598
          %v601 = vadd.f32 %v592, %v599
          %v602 = vadd.f32 %v593, %v599
          %v603 = vmax.f32 %v601, 0.0
          %v604 = vmax.f32 %v602, 0.0
          %v605 = vpack.c.bf16 %v604, %v603
          %v606 = vld [vmem:[#allocation12] sm:$0xff]
          %v607 = vld [vmem:[#allocation12 + $0x8] sm:$0xff]
          %v608 = vld [vmem:[#allocation12 + $0x10] sm:$0xff]
          %v609 = vld [vmem:[#allocation12 + $0x18] sm:$0xff]
          %v610 = vld [vmem:[#allocation12 + $0x20] sm:$0xff]
          %v611 = vld [vmem:[#allocation12 + $0x28] sm:$0xff]
          %v612 = vld [vmem:[#allocation12 + $0x30] sm:$0xff]
          %v613 = vld [vmem:[#allocation12 + $0x38] sm:$0xff]
          %v614 = vld [vmem:[#allocation12 + $0x40] sm:$0xff]
          %v615 = vld [vmem:[#allocation12 + $0x48] sm:$0xff]
          %v616 = vld [vmem:[#allocation12 + $0x50] sm:$0xff]
          %v617 = vld [vmem:[#allocation12 + $0x58] sm:$0xff]
          %v618 = vld [vmem:[#allocation12 + $0x60] sm:$0xff]
          %v619 = vld [vmem:[#allocation12 + $0x68] sm:$0xff]
          %v620 = vld [vmem:[#allocation12 + $0x70] sm:$0xff]
          %v621 = vld [vmem:[#allocation12 + $0x78] sm:$0xff]
          %v622 = vld [vmem:[%s5] sm:$0x3]
          %v624 = vlaneseq
          %v625 = vshrl.u32 %v624, 7
          %v626 = vsub.s32 0, %v625
          %v627 = vrot.slane %v622, %v626
          %v628 = vlaneseq
          %v629 = vshrl.u32 %v628, 7
          %v630 = vsub.s32 1, %v629
          %v631 = vrot.slane %v622, %v630
          %v650 = vunpack.c.l.b16 %v606
          %v651 = vunpack.c.h.b16 %v606
          %v652 = vunpack.c.l.b16 %v607
          %v653 = vunpack.c.h.b16 %v607
          %v654 = vunpack.c.l.b16 %v608
          %v655 = vunpack.c.h.b16 %v608
          %v656 = vunpack.c.l.b16 %v609
          %v657 = vunpack.c.h.b16 %v609
          %v658 = vunpack.c.l.b16 %v610
          %v659 = vunpack.c.h.b16 %v610
          %v660 = vunpack.c.l.b16 %v611
          %v661 = vunpack.c.h.b16 %v611
          %v662 = vunpack.c.l.b16 %v612
          %v663 = vunpack.c.h.b16 %v612
          %v664 = vunpack.c.l.b16 %v613
          %v665 = vunpack.c.h.b16 %v613
          %v666 = vunpack.c.l.b16 %v614
          %v667 = vunpack.c.h.b16 %v614
          %v668 = vunpack.c.l.b16 %v615
          %v669 = vunpack.c.h.b16 %v615
          %v670 = vunpack.c.l.b16 %v616
          %v671 = vunpack.c.h.b16 %v616
          %v672 = vunpack.c.l.b16 %v617
          %v673 = vunpack.c.h.b16 %v617
          %v674 = vunpack.c.l.b16 %v618
          %v675 = vunpack.c.h.b16 %v618
          %v676 = vunpack.c.l.b16 %v619
          %v677 = vunpack.c.h.b16 %v619
          %v678 = vunpack.c.l.b16 %v620
          %v679 = vunpack.c.h.b16 %v620
          %v680 = vunpack.c.l.b16 %v621
          %v681 = vunpack.c.h.b16 %v621
          %v682 = vpack.c.b16 %v652, %v650
          %v683 = vpack.c.b16 %v653, %v651
          %v684 = vpack.c.b16 %v656, %v654
          %v685 = vpack.c.b16 %v657, %v655
          %v686 = vpack.c.b16 %v660, %v658
          %v687 = vpack.c.b16 %v661, %v659
          %v688 = vpack.c.b16 %v664, %v662
          %v689 = vpack.c.b16 %v665, %v663
          %v690 = vpack.c.b16 %v668, %v666
          %v691 = vpack.c.b16 %v669, %v667
          %v692 = vpack.c.b16 %v672, %v670
          %v693 = vpack.c.b16 %v673, %v671
          %v694 = vpack.c.b16 %v676, %v674
          %v695 = vpack.c.b16 %v677, %v675
          %v696 = vpack.c.b16 %v680, %v678
          %v697 = vpack.c.b16 %v681, %v679
          %714 = vmatprep.subr.bf16.mxu0 %v697
          %715 = vmatpush1.bf16.msra.mxu0 %v696
          %716 = vmatprep.subr.bf16.mxu0 %v695
          %717 = vmatpush1.bf16.msra.mxu0 %v694
          %718 = vmatprep.subr.bf16.mxu0 %v693
          %719 = vmatpush1.bf16.msra.mxu0 %v692
          %720 = vmatprep.subr.bf16.mxu0 %v691
          %721 = vmatpush1.bf16.msra.mxu0 %v690
          %722 = vmatprep.subr.bf16.mxu0 %v689
          %723 = vmatpush1.bf16.msra.mxu0 %v688
          %724 = vmatprep.subr.bf16.mxu0 %v687
          %725 = vmatpush1.bf16.msra.mxu0 %v686
          %726 = vmatprep.subr.bf16.mxu0 %v685
          %727 = vmatpush1.bf16.msra.mxu0 %v684
          %728 = vmatprep.subr.bf16.mxu0 %v683
          %729 = vmatpush1.bf16.msra.mxu0 %v682
          %730 = vmatprep.subr.bf16.mxu0 0
          %731 = vmatpush2.bf16.msra.mxu0 0
          %732 = vmatprep.subr.bf16.mxu0 0
          %733 = vmatpush2.bf16.msra.mxu0 0
          %734 = vmatprep.subr.bf16.mxu0 0
          %735 = vmatpush2.bf16.msra.mxu0 0
          %736 = vmatprep.subr.bf16.mxu0 0
          %737 = vmatpush2.bf16.msra.mxu0 0
          %738 = vmatprep.subr.bf16.mxu0 0
          %739 = vmatpush2.bf16.msra.mxu0 0
          %740 = vmatprep.subr.bf16.mxu0 0
          %741 = vmatpush2.bf16.msra.mxu0 0
          %742 = vmatprep.subr.bf16.mxu0 0
          %743 = vmatpush2.bf16.msra.mxu0 0
          %744 = vmatprep.subr.bf16.mxu0 0
          %745 = vmatpush2.bf16.msra.mxu0 0
          %746 = vmatprep.mubr.bf16.mxu0 0
          %747 = vmatmul.mubr.bf16.gmra.mxu0 %v605
          %v748 = vpop.f32.mrf.mxu0
          %v749 = vadd.f32 %v627, %v748
          %v750 = vpop.f32.mrf.mxu0
          %v751 = vadd.f32 %v631, %v750
          %v752 = vpop.f32.mrf.mxu0
          %v753 = vadd.f32 %v627, %v752
          %v754 = vpop.f32.mrf.mxu0
          %v755 = vadd.f32 %v631, %v754
          %756 = vdwg.mxu0
          %757 = vst [vmem:[%s325] sm:$0xff] %v749
          %758 = vst [vmem:[%s325 + $0x8] sm:$0xff] %v751
          %759 = vst [vmem:[%s325 + $0x10] sm:$0xff] %v753
          %760 = vst [vmem:[%s325 + $0x18] sm:$0xff] %v755
        $region68: #{tpu_custom_call.1} parent=43 // pred_fallthru
          _
        %s761 = sand.u32 %s185, 1
        %s762 = scalar_lea.sflag [#allocation9], %s761
        %s763 = sand.u32 %s185, 1
        %s764 = smul.addr %s763, 32
        %s765 = scalar_lea.vmem [#allocation13], %s764
        // Predicated region
        $region73: #{tpu_custom_call.1} parent=43 // pred_check
          %p766 = pneg %p195
        $region74: #{tpu_custom_call.1} parent=43 // pred_check_branch
          %768 = sbr.rel (%p766) target = $region76
        $region75: #{tpu_custom_call.1} parent=43 // pred_region
          %s769 = smul.u32 %s29, %s28
          %s770 = smul.u32 2, %s769
          %s772 = ssub.s32 512, 512
          %773 = vsyncadd %s762, %s772
          %s774 = smul.addr %s770, 2
          %s775 = smul.addr %s774, 128
          %s776 = scalar_lea.hbm %s6, %s775
          %s777 = sshll.u32 %s765, 4
          %s778 = int_to_ptr.vmem [resolvable:$true] %s777
          %783 = dma.vmem_to_hbm [thread:$0]  %s778, 512, %s776, %s762, 256, 256, 16
        $region76: #{tpu_custom_call.1} parent=43 // pred_fallthru
          _
      $region44: #{tpu_custom_call.1} parent=5 // pred_fallthru
        _
      %p784 = scmp.le.s32.totalorder 2, %s19
      // Predicated region
      $region77: #{tpu_custom_call.1} parent=5 // pred_check
        %p785 = pneg %p784
      $region78: #{tpu_custom_call.1} parent=5 // pred_check_branch
        %787 = sbr.rel (%p785) target = $region80
      $region79: #{tpu_custom_call.1} parent=5 // pred_region
        %s788 = ssub.s32 %s19, 2
        // Predicated region
        $region81: #{tpu_custom_call.1} parent=79 // pred_check
          %p789 = pneg %p201
        $region82: #{tpu_custom_call.1} parent=79 // pred_check_branch
          %791 = sbr.rel (%p789) target = $region84
        $region83: #{tpu_custom_call.1} parent=79 // pred_region
          %s792 = sand.u32 %s186, 1
          %s793 = scalar_lea.sflag [#allocation9], %s792
          %s794 = sand.u32 %s186, 1
          %s795 = smul.addr %s794, 32
          %s796 = scalar_lea.vmem [#allocation13], %s795
          %797 = dma.done %s793, 512
        $region84: #{tpu_custom_call.1} parent=79 // pred_fallthru
          _
      $region80: #{tpu_custom_call.1} parent=5 // pred_fallthru
        _
    $region6: #{tpu_custom_call.1} parent=1 // loop_footer
      %s23 = sadd.s32 1, %s19
    $region7: #{tpu_custom_call.1} parent=1 // loop_footer_branch
      %18 = sbr.rel target = $region3
    $region8: #{tpu_custom_call.1} parent=1 // loop_exit
      _
    %798 = vsyncpa [#allocation8], 1
    %s799 = scalar_lea.sflag [#allocation8], 1
    %800 = vsyncpa %s799, 1
    %801 = vsyncpa [#allocation11], 1
    %802 = vsyncpa [#allocation9], 1
    %s803 = scalar_lea.sflag [#allocation9], 1
    %804 = vsyncpa %s803, 1

</llo_original>
